<compile_context>
chip_gen: v6e
topology: v6e:2x2x1
jax: 0.10.0
libtpu: 0.0.40
codegen_flags: <defaults>
</compile_context>

<pallas_src>
import jax
import jax.numpy as jnp
from jax.experimental import pallas as pl
from jax.experimental.pallas import tpu as pltpu

# ---------------- model hyper-parameters (small, consistent with module) ----
N = 16        # number of graph nodes
FIN = 128     # input_dim
C = 128       # hidden_dim (per-head out channels)
H = 3         # num_heads
NCLS = 128    # n_classes
NEG_SLOPE = 0.2


# ---------------------------- Pallas kernel --------------------------------
def gatv2_fc_kernel(x_ref, mask_ref, wlr_ref, blr_ref, att_ref, bgat_ref,
                    wfc_ref, bfc_ref, out_ref):
    # One graph per grid step; all operands fit comfortably in VMEM.
    x = x_ref[...]            # [N, FIN]  bf16
    mask = mask_ref[...]      # [N, N]    f32 additive mask (0 edge / -1e30 non-edge)
    att = att_ref[...]        # [H, C]    f32

    # One fused projection matmul (Wl|Wr concatenated), f32 accumulation.
    xlr = jnp.dot(x, wlr_ref[...],
                  preferred_element_type=jnp.float32) + blr_ref[...]   # [N, 2*H*C]
    xl = xlr[:, :H * C]       # per-head source features  [N, H*C]
    xr = xlr[:, H * C:]       # per-head target features  [N, H*C]

    # GATv2 scores, streamed per head (never materialize [N, H, N, C]).
    e_parts = []
    gl_parts = []
    for h in range(H):
        gl_h = xl[:, h * C:(h + 1) * C]                     # [N, C] sources
        gr_h = xr[:, h * C:(h + 1) * C]                     # [N, C] targets
        s_h = gr_h[:, None, :] + gl_h[None, :, :]           # [N, N, C] f32
        s_h = jnp.maximum(s_h, NEG_SLOPE * s_h)             # leaky_relu(0.2)
        a_h = att[h:h + 1, :][None, :, :]                   # [1, 1, C]
        e_parts.append(jnp.sum(s_h * a_h, axis=-1))         # [N, N]
        gl_parts.append(gl_h)
    e = jnp.stack(e_parts, axis=1)                          # [N, H, N] packed

    # Masked softmax over sources j — single mask/max/exp/sum pass, all heads, f32.
    e = e + mask[:, None, :]
    e = e - jnp.max(e, axis=-1, keepdims=True)
    p = jnp.exp(e)
    alpha = p * pl.reciprocal(jnp.sum(p, axis=-1, keepdims=True), approx=True)

    # Aggregation: one MXU matmul [N, H*N] @ [H*N, C] instead of H tiny ones.
    alpha_cat = jnp.concatenate([alpha[:, h, :] for h in range(H)],
                                axis=-1).astype(jnp.bfloat16)            # [N, H*N]
    gl_cat = jnp.concatenate(gl_parts, axis=0).astype(jnp.bfloat16)      # [H*N, C]
    acc = jnp.dot(alpha_cat, gl_cat,
                  preferred_element_type=jnp.float32)                    # [N, C]

    out_gat = acc * (1.0 / H) + bgat_ref[...]               # concat=False -> head mean
    # fc: Linear(hidden_dim, n_classes), bf16 operands, f32 accumulate.
    out_ref[...] = jnp.dot(out_gat.astype(jnp.bfloat16), wfc_ref[...],
                           preferred_element_type=jnp.float32) + bfc_ref[...]


@jax.jit
def gat_forward_pallas(xb, maskb, packed):
    """Batched forward over B graphs.

    xb:    [B, N, FIN] bf16 node features
    maskb: [B, N, N]   f32 additive adjacency masks
    packed: dict of pre-packed weights (pack_params) — packing is NOT redone here.
    """
    B = xb.shape[0]

    def const_spec(shape):
        return pl.BlockSpec(shape, lambda b: (0,) * len(shape))

    return pl.pallas_call(
        gatv2_fc_kernel,
        out_shape=jax.ShapeDtypeStruct((B, N, NCLS), jnp.float32),
        grid=(B,),
        in_specs=[
            pl.BlockSpec((None, N, FIN), lambda b: (b, 0, 0)),   # x   (per-graph)
            pl.BlockSpec((None, N, N), lambda b: (b, 0, 0)),     # mask(per-graph)
            const_spec((FIN, 2 * H * C)),                        # wlr (resident)
            const_spec((1, 2 * H * C)),                          # blr
            const_spec((H, C)),                                  # att
            const_spec((1, C)),                                  # bgat
            const_spec((C, NCLS)),                               # wfc
            const_spec((1, NCLS)),                               # bfc
        ],
        out_specs=pl.BlockSpec((None, N, NCLS), lambda b: (b, 0, 0)),
        compiler_params=pltpu.CompilerParams(
            dimension_semantics=("parallel",)),
    )(xb, maskb, packed["wlr"], packed["blr"], packed["att"],
      packed["bgat"], packed["wfc"], packed["bfc"])


# ------------------------------ glue / setup --------------------------------
def init_params(key):
    ks = jax.random.split(key, 8)

    def glorot(k, shape):
        fan_in, fan_out = shape[0], shape[-1]
        lim = (6.0 / (fan_in + fan_out)) ** 0.5
        return jax.random.uniform(k, shape, jnp.float32, -lim, lim)

    return {
        "Wl":   glorot(ks[0], (FIN, H * C)),
        "bl":   jnp.zeros((1, H * C), jnp.float32),
        "Wr":   glorot(ks[1], (FIN, H * C)),
        "br":   jnp.zeros((1, H * C), jnp.float32),
        "att":  glorot(ks[2], (H, C)),
        "bgat": jnp.zeros((1, C), jnp.float32),
        "Wfc":  glorot(ks[3], (C, NCLS)),
        "bfc":  jnp.zeros((1, NCLS), jnp.float32),
    }


def pack_params(p):
    """One-time weight packing — hoisted out of the per-call path."""
    return {
        "wlr":  jnp.concatenate([p["Wl"], p["Wr"]], axis=1).astype(jnp.bfloat16),
        "blr":  jnp.concatenate([p["bl"], p["br"]], axis=1),   # f32
        "att":  p["att"],
        "bgat": p["bgat"],
        "wfc":  p["Wfc"].astype(jnp.bfloat16),
        "bfc":  p["bfc"],
    }


def build_additive_mask(edge_index, num_nodes):
    """edge_index: [E, 2] (source, target) -> additive softmax mask (built once)."""
    src = edge_index[:, 0]
    tgt = edge_index[:, 1]
    adj = jnp.zeros((num_nodes, num_nodes), jnp.float32)
    adj = adj.at[tgt, src].set(1.0)
    # GATv2Conv default add_self_loops=True
    adj = adj.at[jnp.arange(num_nodes), jnp.arange(num_nodes)].set(1.0)
    return jnp.where(adj > 0, 0.0, -1e30).astype(jnp.float32)


def gat_model_3_forward(x, edge_index, exps, exps_c, packed):
    """Mirrors GATModel_3.forward, centroid_layer=False, return_attention=False."""
    mask = build_additive_mask(edge_index, x.shape[0])      # graph structure: once
    h = gat_forward_pallas(x.astype(jnp.bfloat16)[None], mask[None], packed)[0]
    h_c = None                # TODO(synk): centroid_layer=True path not wired up.
    centroid_index = []
    return h, exps, h_c, exps_c, centroid_index


# ----------------------------- reference (plain JAX) ------------------------
def gat_forward_ref(x, mask, p):
    """Same math, same bf16 rounding points as the kernel, f32 elsewhere."""
    hp = jax.lax.Precision.HIGHEST
    xf = x.astype(jnp.bfloat16).astype(jnp.float32)
    Wl = p["Wl"].astype(jnp.bfloat16).astype(jnp.float32)
    Wr = p["Wr"].astype(jnp.bfloat16).astype(jnp.float32)
    Wfc = p["Wfc"].astype(jnp.bfloat16).astype(jnp.float32)
    xl = jnp.dot(xf, Wl, precision=hp) + p["bl"]
    xr = jnp.dot(xf, Wr, precision=hp) + p["br"]
    acc = jnp.zeros((N, C), jnp.float32)
    for h in range(H):
        gl = xl[:, h * C:(h + 1) * C]
        gr = xr[:, h * C:(h + 1) * C]
        s = gr[:, None, :] + gl[None, :, :]
        s = jnp.where(s > 0, s, NEG_SLOPE * s)
        e = jnp.sum(s * p["att"][h][None, None, :], axis=-1) + mask
        e = e - jnp.max(e, axis=1, keepdims=True)
        pe = jnp.exp(e)
        alpha = pe / jnp.sum(pe, axis=1, keepdims=True)
        acc = acc + jnp.dot(alpha.astype(jnp.bfloat16).astype(jnp.float32),
                            gl.astype(jnp.bfloat16).astype(jnp.float32),
                            precision=hp)
    out = acc / H + p["bgat"]
    return jnp.dot(out.astype(jnp.bfloat16).astype(jnp.float32),
                   Wfc, precision=hp) + p["bfc"]


# ---------------------------------- main -------------------------------------
if __name__ == "__main__":
    key = jax.random.PRNGKey(0)
    k_x, k_p, k_e1, k_e2 = jax.random.split(key, 4)

    B = 4                                       # batch of graphs (grid axis)
    x_batch = jax.random.normal(k_x, (B, N, FIN), jnp.float32)

    # deterministic per-graph edge lists [E, 2] = (source, target)
    edge_indices = []
    masks = []
    for b in range(B):
        src = jnp.concatenate([jnp.arange(N)] * 3)
        tgt = jnp.concatenate([(jnp.arange(N) + d) % N for d in (1 + b, 2, 5 + b)])
        ei = jnp.stack([src, tgt], axis=1).astype(jnp.int32)     # [48, 2]
        edge_indices.append(ei)
        masks.append(build_additive_mask(ei, N))                 # hoisted, once per graph
    mask_batch = jnp.stack(masks, axis=0)                        # [B, N, N]

    params = init_params(k_p)
    packed = pack_params(params)                                 # hoisted, once

    # pass-through tensors of the data tuple
    exps = jax.random.normal(k_e1, (N, 4), jnp.float32)
    exps_c = jax.random.normal(k_e2, (5, 4), jnp.float32)

    # Batched Pallas forward: one grid step per graph, weights VMEM-resident.
    out = gat_forward_pallas(x_batch.astype(jnp.bfloat16), mask_batch, packed)
    out = jax.block_until_ready(out)
    assert out.shape == (B, N, NCLS)

    # sanity check against pure-JAX reference (same bf16 rounding points)
    for b in range(B):
        ref_b = gat_forward_ref(x_batch[b], mask_batch[b], params)
        assert bool(jnp.allclose(out[b], ref_b, atol=1e-2, rtol=1e-2)), \
            "mismatch vs reference"

    # module-faithful single-graph path (GATModel_3.forward tuple)
    h, exps_out, h_c, exps_c_out, centroid_index = gat_model_3_forward(
        x_batch[0], edge_indices[0], exps, exps_c, packed)
    h = jax.block_until_ready(h)
    assert h.shape == (N, NCLS)
    ref0 = gat_forward_ref(x_batch[0], mask_batch[0], params)
    assert bool(jnp.allclose(h, ref0, atol=1e-2, rtol=1e-2)), "mismatch vs reference"

    print("KERNEL_OK")
</pallas_src>

<mosaic_0001>
module attributes {stable_mosaic.version = 11 : i64} {
  func.func @gatv2_fc_kernel(%arg0: i32, %arg1: memref<1x16x128xbf16, #tpu.memory_space<vmem>>, %arg2: memref<1x16x16xf32, #tpu.memory_space<vmem>>, %arg3: memref<128x768xbf16, #tpu.memory_space<vmem>>, %arg4: memref<1x768xf32, #tpu.memory_space<vmem>>, %arg5: memref<3x128xf32, #tpu.memory_space<vmem>>, %arg6: memref<1x128xf32, #tpu.memory_space<vmem>>, %arg7: memref<128x128xbf16, #tpu.memory_space<vmem>>, %arg8: memref<1x128xf32, #tpu.memory_space<vmem>>, %arg9: memref<1x16x128xf32, #tpu.memory_space<vmem>>) attributes {dimension_semantics = [#tpu.dimension_semantics<parallel>], iteration_bounds = array<i64: 4>, scalar_prefetch = 0 : i64, scratch_operands = 0 : i64, tpu.core_type = #tpu.core_type<tc>, window_params = [{transform_indices = @transform_0, window_bounds = array<i64: 1, 16, 128>}, {transform_indices = @transform_1, window_bounds = array<i64: 1, 16, 16>}, {pipeline_mode = #tpu.pipeline_mode<synchronous>, transform_indices = @transform_2, window_bounds = array<i64: 128, 768>}, {pipeline_mode = #tpu.pipeline_mode<synchronous>, transform_indices = @transform_3, window_bounds = array<i64: 1, 768>}, {pipeline_mode = #tpu.pipeline_mode<synchronous>, transform_indices = @transform_4, window_bounds = array<i64: 3, 128>}, {pipeline_mode = #tpu.pipeline_mode<synchronous>, transform_indices = @transform_5, window_bounds = array<i64: 1, 128>}, {pipeline_mode = #tpu.pipeline_mode<synchronous>, transform_indices = @transform_6, window_bounds = array<i64: 128, 128>}, {pipeline_mode = #tpu.pipeline_mode<synchronous>, transform_indices = @transform_7, window_bounds = array<i64: 1, 128>}, {transform_indices = @transform_8, window_bounds = array<i64: 1, 16, 128>}]} {
    %c0 = arith.constant 0 : index
    %c0_0 = arith.constant 0 : index
    %c0_1 = arith.constant 0 : index
    %0 = vector.load %arg1[%c0, %c0_0, %c0_1] : memref<1x16x128xbf16, #tpu.memory_space<vmem>>, vector<1x16x128xbf16>
    %1 = vector.shape_cast %0 : vector<1x16x128xbf16> to vector<16x128xbf16>
    %c0_2 = arith.constant 0 : index
    %c0_3 = arith.constant 0 : index
    %c0_4 = arith.constant 0 : index
    %2 = vector.load %arg2[%c0_2, %c0_3, %c0_4] : memref<1x16x16xf32, #tpu.memory_space<vmem>>, vector<1x16x16xf32>
    %3 = vector.shape_cast %2 : vector<1x16x16xf32> to vector<16x16xf32>
    %c0_5 = arith.constant 0 : index
    %c0_6 = arith.constant 0 : index
    %4 = vector.load %arg5[%c0_5, %c0_6] : memref<3x128xf32, #tpu.memory_space<vmem>>, vector<3x128xf32>
    %c0_7 = arith.constant 0 : index
    %c0_8 = arith.constant 0 : index
    %5 = vector.load %arg3[%c0_7, %c0_8] : memref<128x768xbf16, #tpu.memory_space<vmem>>, vector<128x768xbf16>
    %cst = arith.constant dense<0.000000e+00> : vector<16x768xf32>
    %6 = tpu.matmul %1, %5, %cst {dimension_numbers = #tpu.dot_dimension_numbers<[1], [0], [0], [1], [0, 0, 1, 1], [], []>} : vector<16x128xbf16>, vector<128x768xbf16>, vector<16x768xf32> -> vector<16x768xf32>
    %c0_9 = arith.constant 0 : index
    %c0_10 = arith.constant 0 : index
    %7 = vector.load %arg4[%c0_9, %c0_10] : memref<1x768xf32, #tpu.memory_space<vmem>>, vector<1x768xf32>
    %8 = vector.broadcast %7 : vector<1x768xf32> to vector<16x768xf32>
    %9 = arith.addf %6, %8 : vector<16x768xf32>
    %10 = vector.extract_strided_slice %9 {offsets = [0, 0], sizes = [16, 384], strides = [1, 1]} : vector<16x768xf32> to vector<16x384xf32>
    %11 = vector.extract_strided_slice %9 {offsets = [0, 384], sizes = [16, 384], strides = [1, 1]} : vector<16x768xf32> to vector<16x384xf32>
    %12 = vector.extract_strided_slice %10 {offsets = [0, 0], sizes = [16, 128], strides = [1, 1]} : vector<16x384xf32> to vector<16x128xf32>
    %13 = vector.extract_strided_slice %11 {offsets = [0, 0], sizes = [16, 128], strides = [1, 1]} : vector<16x384xf32> to vector<16x128xf32>
    %14 = vector.shape_cast %13 : vector<16x128xf32> to vector<16x1x128xf32>
    %15 = vector.shape_cast %12 : vector<16x128xf32> to vector<1x16x128xf32>
    %16 = vector.broadcast %14 : vector<16x1x128xf32> to vector<16x16x128xf32>
    %17 = vector.broadcast %15 : vector<1x16x128xf32> to vector<16x16x128xf32>
    %18 = arith.addf %16, %17 : vector<16x16x128xf32>
    %cst_11 = arith.constant 2.000000e-01 : f32
    %19 = vector.broadcast %cst_11 : f32 to vector<16x16x128xf32>
    %20 = arith.mulf %19, %18 : vector<16x16x128xf32>
    %21 = arith.maximumf %18, %20 : vector<16x16x128xf32>
    %22 = vector.extract_strided_slice %4 {offsets = [0, 0], sizes = [1, 128], strides = [1, 1]} : vector<3x128xf32> to vector<1x128xf32>
    %23 = vector.shape_cast %22 : vector<1x128xf32> to vector<1x1x128xf32>
    %24 = vector.broadcast %23 : vector<1x1x128xf32> to vector<16x16x128xf32>
    %25 = arith.mulf %21, %24 : vector<16x16x128xf32>
    %cst_12 = arith.constant dense<0.000000e+00> : vector<16x16xf32>
    %26 = vector.multi_reduction <add>, %25, %cst_12 [2] : vector<16x16x128xf32> to vector<16x16xf32>
    %27 = vector.extract_strided_slice %10 {offsets = [0, 128], sizes = [16, 128], strides = [1, 1]} : vector<16x384xf32> to vector<16x128xf32>
    %28 = vector.extract_strided_slice %11 {offsets = [0, 128], sizes = [16, 128], strides = [1, 1]} : vector<16x384xf32> to vector<16x128xf32>
    %29 = vector.shape_cast %28 : vector<16x128xf32> to vector<16x1x128xf32>
    %30 = vector.shape_cast %27 : vector<16x128xf32> to vector<1x16x128xf32>
    %31 = vector.broadcast %29 : vector<16x1x128xf32> to vector<16x16x128xf32>
    %32 = vector.broadcast %30 : vector<1x16x128xf32> to vector<16x16x128xf32>
    %33 = arith.addf %31, %32 : vector<16x16x128xf32>
    %cst_13 = arith.constant 2.000000e-01 : f32
    %34 = vector.broadcast %cst_13 : f32 to vector<16x16x128xf32>
    %35 = arith.mulf %34, %33 : vector<16x16x128xf32>
    %36 = arith.maximumf %33, %35 : vector<16x16x128xf32>
    %37 = vector.extract_strided_slice %4 {offsets = [1, 0], sizes = [1, 128], strides = [1, 1]} : vector<3x128xf32> to vector<1x128xf32>
    %38 = vector.shape_cast %37 : vector<1x128xf32> to vector<1x1x128xf32>
    %39 = vector.broadcast %38 : vector<1x1x128xf32> to vector<16x16x128xf32>
    %40 = arith.mulf %36, %39 : vector<16x16x128xf32>
    %cst_14 = arith.constant dense<0.000000e+00> : vector<16x16xf32>
    %41 = vector.multi_reduction <add>, %40, %cst_14 [2] : vector<16x16x128xf32> to vector<16x16xf32>
    %42 = vector.extract_strided_slice %10 {offsets = [0, 256], sizes = [16, 128], strides = [1, 1]} : vector<16x384xf32> to vector<16x128xf32>
    %43 = vector.extract_strided_slice %11 {offsets = [0, 256], sizes = [16, 128], strides = [1, 1]} : vector<16x384xf32> to vector<16x128xf32>
    %44 = vector.shape_cast %43 : vector<16x128xf32> to vector<16x1x128xf32>
    %45 = vector.shape_cast %42 : vector<16x128xf32> to vector<1x16x128xf32>
    %46 = vector.broadcast %44 : vector<16x1x128xf32> to vector<16x16x128xf32>
    %47 = vector.broadcast %45 : vector<1x16x128xf32> to vector<16x16x128xf32>
    %48 = arith.addf %46, %47 : vector<16x16x128xf32>
    %cst_15 = arith.constant 2.000000e-01 : f32
    %49 = vector.broadcast %cst_15 : f32 to vector<16x16x128xf32>
    %50 = arith.mulf %49, %48 : vector<16x16x128xf32>
    %51 = arith.maximumf %48, %50 : vector<16x16x128xf32>
    %52 = vector.extract_strided_slice %4 {offsets = [2, 0], sizes = [1, 128], strides = [1, 1]} : vector<3x128xf32> to vector<1x128xf32>
    %53 = vector.shape_cast %52 : vector<1x128xf32> to vector<1x1x128xf32>
    %54 = vector.broadcast %53 : vector<1x1x128xf32> to vector<16x16x128xf32>
    %55 = arith.mulf %51, %54 : vector<16x16x128xf32>
    %cst_16 = arith.constant dense<0.000000e+00> : vector<16x16xf32>
    %56 = vector.multi_reduction <add>, %55, %cst_16 [2] : vector<16x16x128xf32> to vector<16x16xf32>
    %57 = vector.shape_cast %26 : vector<16x16xf32> to vector<16x1x16xf32>
    %58 = vector.shape_cast %41 : vector<16x16xf32> to vector<16x1x16xf32>
    %59 = vector.shape_cast %56 : vector<16x16xf32> to vector<16x1x16xf32>
    %60 = tpu.concatenate %57, %58, %59 in 1 : vector<16x1x16xf32>, vector<16x1x16xf32>, vector<16x1x16xf32> -> vector<16x3x16xf32>
    %61 = vector.shape_cast %3 : vector<16x16xf32> to vector<16x1x16xf32>
    %62 = vector.broadcast %61 : vector<16x1x16xf32> to vector<16x3x16xf32>
    %63 = arith.addf %60, %62 : vector<16x3x16xf32>
    %cst_17 = arith.constant dense<0xFF800000> : vector<16x3xf32>
    %64 = vector.multi_reduction <maximumf>, %63, %cst_17 [2] : vector<16x3x16xf32> to vector<16x3xf32>
    %65 = vector.shape_cast %64 : vector<16x3xf32> to vector<16x3x1xf32>
    %66 = vector.broadcast %65 : vector<16x3x1xf32> to vector<16x3x16xf32>
    %67 = arith.subf %63, %66 : vector<16x3x16xf32>
    %68 = math.exp %67 : vector<16x3x16xf32>
    %cst_18 = arith.constant dense<0.000000e+00> : vector<16x3xf32>
    %69 = vector.multi_reduction <add>, %68, %cst_18 [2] : vector<16x3x16xf32> to vector<16x3xf32>
    %70 = vector.shape_cast %69 : vector<16x3xf32> to vector<16x3x1xf32>
    %71 = tpu.reciprocal %70 {approx = true} : vector<16x3x1xf32> -> vector<16x3x1xf32>
    %72 = vector.broadcast %71 : vector<16x3x1xf32> to vector<16x3x16xf32>
    %73 = arith.mulf %68, %72 : vector<16x3x16xf32>
    %74 = vector.extract_strided_slice %73 {offsets = [0, 0, 0], sizes = [16, 1, 16], strides = [1, 1, 1]} : vector<16x3x16xf32> to vector<16x1x16xf32>
    %75 = vector.shape_cast %74 : vector<16x1x16xf32> to vector<16x16xf32>
    %76 = vector.extract_strided_slice %73 {offsets = [0, 1, 0], sizes = [16, 1, 16], strides = [1, 1, 1]} : vector<16x3x16xf32> to vector<16x1x16xf32>
    %77 = vector.shape_cast %76 : vector<16x1x16xf32> to vector<16x16xf32>
    %78 = vector.extract_strided_slice %73 {offsets = [0, 2, 0], sizes = [16, 1, 16], strides = [1, 1, 1]} : vector<16x3x16xf32> to vector<16x1x16xf32>
    %79 = vector.shape_cast %78 : vector<16x1x16xf32> to vector<16x16xf32>
    %80 = tpu.concatenate %75, %77, %79 in 1 : vector<16x16xf32>, vector<16x16xf32>, vector<16x16xf32> -> vector<16x48xf32>
    %81 = arith.truncf %80 : vector<16x48xf32> to vector<16x48xbf16>
    %82 = tpu.concatenate %12, %27, %42 in 0 : vector<16x128xf32>, vector<16x128xf32>, vector<16x128xf32> -> vector<48x128xf32>
    %83 = arith.truncf %82 : vector<48x128xf32> to vector<48x128xbf16>
    %cst_19 = arith.constant dense<0.000000e+00> : vector<16x128xf32>
    %84 = tpu.matmul %81, %83, %cst_19 {dimension_numbers = #tpu.dot_dimension_numbers<[1], [0], [0], [1], [0, 0, 1, 1], [], []>} : vector<16x48xbf16>, vector<48x128xbf16>, vector<16x128xf32> -> vector<16x128xf32>
    %cst_20 = arith.constant 0.333333343 : f32
    %85 = vector.broadcast %cst_20 : f32 to vector<16x128xf32>
    %86 = arith.mulf %84, %85 : vector<16x128xf32>
    %c0_21 = arith.constant 0 : index
    %c0_22 = arith.constant 0 : index
    %87 = vector.load %arg6[%c0_21, %c0_22] : memref<1x128xf32, #tpu.memory_space<vmem>>, vector<1x128xf32>
    %88 = vector.broadcast %87 : vector<1x128xf32> to vector<16x128xf32>
    %89 = arith.addf %86, %88 : vector<16x128xf32>
    %90 = arith.truncf %89 : vector<16x128xf32> to vector<16x128xbf16>
    %c0_23 = arith.constant 0 : index
    %c0_24 = arith.constant 0 : index
    %91 = vector.load %arg7[%c0_23, %c0_24] : memref<128x128xbf16, #tpu.memory_space<vmem>>, vector<128x128xbf16>
    %cst_25 = arith.constant dense<0.000000e+00> : vector<16x128xf32>
    %92 = tpu.matmul %90, %91, %cst_25 {dimension_numbers = #tpu.dot_dimension_numbers<[1], [0], [0], [1], [0, 0, 1, 1], [], []>} : vector<16x128xbf16>, vector<128x128xbf16>, vector<16x128xf32> -> vector<16x128xf32>
    %c0_26 = arith.constant 0 : index
    %c0_27 = arith.constant 0 : index
    %93 = vector.load %arg8[%c0_26, %c0_27] : memref<1x128xf32, #tpu.memory_space<vmem>>, vector<1x128xf32>
    %94 = vector.broadcast %93 : vector<1x128xf32> to vector<16x128xf32>
    %95 = arith.addf %92, %94 : vector<16x128xf32>
    %c0_28 = arith.constant 0 : index
    %c0_29 = arith.constant 0 : index
    %c0_30 = arith.constant 0 : index
    %96 = vector.load %arg9[%c0_28, %c0_29, %c0_30] : memref<1x16x128xf32, #tpu.memory_space<vmem>>, vector<1x16x128xf32>
    %97 = vector.shape_cast %96 : vector<1x16x128xf32> to vector<16x128xf32>
    %98 = vector.shape_cast %95 : vector<16x128xf32> to vector<1x16x128xf32>
    tpu.vector_store %arg9[%c0_28, %c0_29, %c0_30], %98 {strides = array<i32>} : memref<1x16x128xf32, #tpu.memory_space<vmem>>, vector<1x16x128xf32>,
    return
  }
  func.func @transform_0(%arg0: i32) -> (i32, i32, i32) {
    %c0_i32 = arith.constant 0 : i32
    %c0_i32_0 = arith.constant 0 : i32
    %c0_i32_1 = arith.constant 0 : i32
    return %arg0, %c0_i32, %c0_i32_0 : i32, i32, i32
  }
  func.func @transform_1(%arg0: i32) -> (i32, i32, i32) {
    %c0_i32 = arith.constant 0 : i32
    %c0_i32_0 = arith.constant 0 : i32
    %c0_i32_1 = arith.constant 0 : i32
    return %arg0, %c0_i32, %c0_i32_0 : i32, i32, i32
  }
  func.func @transform_2(%arg0: i32) -> (i32, i32) {
    %c0_i32 = arith.constant 0 : i32
    %c0_i32_0 = arith.constant 0 : i32
    %c0_i32_1 = arith.constant 0 : i32
    return %c0_i32, %c0_i32_0 : i32, i32
  }
  func.func @transform_3(%arg0: i32) -> (i32, i32) {
    %c0_i32 = arith.constant 0 : i32
    %c0_i32_0 = arith.constant 0 : i32
    %c0_i32_1 = arith.constant 0 : i32
    return %c0_i32, %c0_i32_0 : i32, i32
  }
  func.func @transform_4(%arg0: i32) -> (i32, i32) {
    %c0_i32 = arith.constant 0 : i32
    %c0_i32_0 = arith.constant 0 : i32
    %c0_i32_1 = arith.constant 0 : i32
    return %c0_i32, %c0_i32_0 : i32, i32
  }
  func.func @transform_5(%arg0: i32) -> (i32, i32) {
    %c0_i32 = arith.constant 0 : i32
    %c0_i32_0 = arith.constant 0 : i32
    %c0_i32_1 = arith.constant 0 : i32
    return %c0_i32, %c0_i32_0 : i32, i32
  }
  func.func @transform_6(%arg0: i32) -> (i32, i32) {
    %c0_i32 = arith.constant 0 : i32
    %c0_i32_0 = arith.constant 0 : i32
    %c0_i32_1 = arith.constant 0 : i32
    return %c0_i32, %c0_i32_0 : i32, i32
  }
  func.func @transform_7(%arg0: i32) -> (i32, i32) {
    %c0_i32 = arith.constant 0 : i32
    %c0_i32_0 = arith.constant 0 : i32
    %c0_i32_1 = arith.constant 0 : i32
    return %c0_i32, %c0_i32_0 : i32, i32
  }
  func.func @transform_8(%arg0: i32) -> (i32, i32, i32) {
    %c0_i32 = arith.constant 0 : i32
    %c0_i32_0 = arith.constant 0 : i32
    %c0_i32_1 = arith.constant 0 : i32
    return %arg0, %c0_i32, %c0_i32_0 : i32, i32, i32
  }
}

</mosaic_0001>

<llo_original>
// kernel: gat_forward_pallas.1
$region0: #{gat_forward_pallas.1}
  #allocation0 [shape = 'u32[]', space=smem, size = 0x4, offset = 0x4, fixed_abs, tag = 'smem constant byte address 0x4 - core index']
  #allocation1 [shape = 'u32[144,128]{1,0:T(1,128)}', space=vmem, size = 0x12000, scoped, tag = 'internal scratch']
  %s0 = inlined_call_operand.hbm [shape: bf16[4,16,128], index: 0, kind: input, shape index: {}]
  %s1 = inlined_call_operand.hbm [shape: f32[4,16,16], index: 1, kind: input, shape index: {}]
  %s2 = inlined_call_operand.hbm [shape: bf16[128,768], index: 2, kind: input, shape index: {}]
  %s3 = inlined_call_operand.vmem [shape: f32[1,768], index: 3, kind: input, shape index: {}]
  %s4 = inlined_call_operand.hbm [shape: f32[3,128], index: 4, kind: input, shape index: {}]
  %s5 = inlined_call_operand.vmem [shape: f32[1,128], index: 5, kind: input, shape index: {}]
  %s6 = inlined_call_operand.hbm [shape: bf16[128,128], index: 6, kind: input, shape index: {}]
  %s7 = inlined_call_operand.vmem [shape: f32[1,128], index: 7, kind: input, shape index: {}]
  %s8 = inlined_call_operand.hbm [shape: f32[4,16,128], index: 8, kind: output, shape index: {}]
  %s9 = sld [smem:[#allocation0]]
  $region85: #{gat_forward_pallas.1} parent=0
    _
  %s11 = ssub.s32 1, %s9
  %s12 = scalar_select 0, %s11, %s9
  $region1: #{gat_forward_pallas.1} parent=0
    #allocation2 [shape = 'u8[8192]{0}', space=vmem, size = 0x2000, scoped, tag = 'input window, operand 0']
    #allocation3 [shape = 's32[2]{0}', space=sflag, size = 0x8, scoped, tag = 'scoped memory for gat_forward_pallas.1']
    #allocation4 [shape = 's32[2]{0}', space=sflag, size = 0x8, scoped, tag = 'scoped memory for gat_forward_pallas.1']
    #allocation5 [shape = 'u8[16384]{0}', space=vmem, size = 0x4000, scoped, tag = 'input window, operand 1']
    #allocation6 [shape = 's32[2]{0}', space=sflag, size = 0x8, scoped, tag = 'scoped memory for gat_forward_pallas.1']
    #allocation7 [shape = 'u8[196608]{0}', space=vmem, size = 0x30000, scoped, tag = 'input window, operand 2, single buffered']
    #allocation8 [shape = 'u8[2048]{0}', space=vmem, size = 0x800, scoped, tag = 'input window, operand 4, single buffered']
    #allocation9 [shape = 's32[1]{0}', space=sflag, size = 0x4, scoped, tag = 'scoped memory for gat_forward_pallas.1']
    #allocation10 [shape = 'u8[32768]{0}', space=vmem, size = 0x8000, scoped, tag = 'input window, operand 6, single buffered']
    #allocation11 [shape = 'u8[16384]{0}', space=vmem, size = 0x4000, scoped, tag = 'output window, operand 0']
    %13 = vsyncpa [#allocation3], 0
    %s14 = scalar_lea.sflag [#allocation3], 1
    %15 = vsyncpa %s14, 0
    %16 = vsyncpa [#allocation6], 0
    %s17 = scalar_lea.sflag [#allocation6], 1
    %18 = vsyncpa %s17, 0
    %19 = vsyncpa [#allocation9], 0
    %20 = vsyncpa [#allocation4], 0
    %s21 = scalar_lea.sflag [#allocation4], 1
    %22 = vsyncpa %s21, 0
    loop: start=0, step=1, limit=6
    $region2: #{gat_forward_pallas.1} parent=1 // loop_pre_header
      _
    $region3: #{gat_forward_pallas.1} parent=1 // loop_header
      %s24 = sphi 0, %s28
      %p25 = scmp.ge.s32.totalorder %s24, 6
      %s34 = sphi 0, %s36
      %s37 = sphi 0, %s34
      %s38 = sphi 0, %s37
      %s54 = sphi 0, %s38
      %s60 = sphi 0, %s62
      %s63 = sphi 0, %s60
      %s64 = sphi 0, %s63
      %s80 = sphi 0, %s64
      %s84 = sphi 0, %s84
      %s86 = sphi 0, %s84
      %s87 = sphi 0, %s86
      %s101 = sphi 0, %s87
      %s105 = sphi 0, %s105
      %s107 = sphi 0, %s105
      %s108 = sphi 0, %s107
      %s122 = sphi 0, %s108
      %s126 = sphi 0, %s126
      %s128 = sphi 0, %s126
      %s129 = sphi 0, %s128
      %s143 = sphi 0, %s129
      %s147 = sphi 0, %s147
      %s149 = sphi 0, %s147
      %s150 = sphi 0, %s149
      %s164 = sphi 0, %s150
      %s168 = sphi 0, %s168
      %s170 = sphi 0, %s168
      %s171 = sphi 0, %s170
      %s185 = sphi 0, %s171
      %s189 = sphi 0, %s189
      %s191 = sphi 0, %s189
      %s192 = sphi 0, %s191
      %s206 = sphi 0, %s192
      %s212 = sphi 0, %s214
      %s215 = sphi 0, %s212
      %s216 = sphi 0, %s215
      %s232 = sphi 0, %s216
    $region4: #{gat_forward_pallas.1} parent=1 // loop_header_branch
      %27 = sbr.rel (%p25) target = $region8
    $region5: #{gat_forward_pallas.1} parent=1 // loop_body
      %s29 = ssub.s32 %s24, 1
      %s30 = ssub.s32 %s24, 2
      %s31 = sadd.s32 %s24, 1
      %s32 = ssub.s32 %s24, %s31
      %p33 = scmp.eq.s32.totalorder %s32, 0
      %s35 = sadd.s32 %s34, 1
      %s36 = scalar_select %p33, %s34, %s35
      %p39 = pneg %p33
      %p40 = scmp.eq.s32.totalorder %s24, 3
      %p41 = por %p39, %p40
      %p42 = scmp.ne.s32.totalorder %s34, %s37
      %p43 = scmp.eq.s32.totalorder %s24, 0
      %p44 = por %p42, %p43
      %p45 = scmp.ne.s32.totalorder %s34, %s37
      %p46 = scmp.eq.s32.totalorder %s29, 3
      %p47 = por %p45, %p46
      %p48 = scmp.ne.s32.totalorder %s37, %s38
      %p49 = scmp.eq.s32.totalorder %s29, 0
      %p50 = por %p48, %p49
      %p51 = scmp.ne.s32.totalorder %s37, %s38
      %p52 = scmp.eq.s32.totalorder %s30, 3
      %p53 = por %p51, %p52
      %p55 = scmp.ne.s32.totalorder %s38, %s54
      %p56 = scmp.eq.s32.totalorder %s30, 0
      %p57 = por %p55, %p56
      %s58 = ssub.s32 %s24, %s31
      %p59 = scmp.eq.s32.totalorder %s58, 0
      %s61 = sadd.s32 %s60, 1
      %s62 = scalar_select %p59, %s60, %s61
      %p65 = pneg %p59
      %p66 = scmp.eq.s32.totalorder %s24, 3
      %p67 = por %p65, %p66
      %p68 = scmp.ne.s32.totalorder %s60, %s63
      %p69 = scmp.eq.s32.totalorder %s24, 0
      %p70 = por %p68, %p69
      %p71 = scmp.ne.s32.totalorder %s60, %s63
      %p72 = scmp.eq.s32.totalorder %s29, 3
      %p73 = por %p71, %p72
      %p74 = scmp.ne.s32.totalorder %s63, %s64
      %p75 = scmp.eq.s32.totalorder %s29, 0
      %p76 = por %p74, %p75
      %p77 = scmp.ne.s32.totalorder %s63, %s64
      %p78 = scmp.eq.s32.totalorder %s30, 3
      %p79 = por %p77, %p78
      %p81 = scmp.ne.s32.totalorder %s64, %s80
      %p82 = scmp.eq.s32.totalorder %s30, 0
      %p83 = por %p81, %p82
      %s85 = sadd.s32 %s84, 1
      %p88 = scmp.eq.s32.totalorder %s24, 3
      %p89 = scmp.ne.s32.totalorder %s84, %s86
      %p90 = scmp.eq.s32.totalorder %s24, 0
      %p91 = por %p89, %p90
      %p92 = scmp.ne.s32.totalorder %s84, %s86
      %p93 = scmp.eq.s32.totalorder %s29, 3
      %p94 = por %p92, %p93
      %p95 = scmp.ne.s32.totalorder %s86, %s87
      %p96 = scmp.eq.s32.totalorder %s29, 0
      %p97 = por %p95, %p96
      %p98 = scmp.ne.s32.totalorder %s86, %s87
      %p99 = scmp.eq.s32.totalorder %s30, 3
      %p100 = por %p98, %p99
      %p102 = scmp.ne.s32.totalorder %s87, %s101
      %p103 = scmp.eq.s32.totalorder %s30, 0
      %p104 = por %p102, %p103
      %s106 = sadd.s32 %s105, 1
      %p109 = scmp.eq.s32.totalorder %s24, 3
      %p110 = scmp.ne.s32.totalorder %s105, %s107
      %p111 = scmp.eq.s32.totalorder %s24, 0
      %p112 = por %p110, %p111
      %p113 = scmp.ne.s32.totalorder %s105, %s107
      %p114 = scmp.eq.s32.totalorder %s29, 3
      %p115 = por %p113, %p114
      %p116 = scmp.ne.s32.totalorder %s107, %s108
      %p117 = scmp.eq.s32.totalorder %s29, 0
      %p118 = por %p116, %p117
      %p119 = scmp.ne.s32.totalorder %s107, %s108
      %p120 = scmp.eq.s32.totalorder %s30, 3
      %p121 = por %p119, %p120
      %p123 = scmp.ne.s32.totalorder %s108, %s122
      %p124 = scmp.eq.s32.totalorder %s30, 0
      %p125 = por %p123, %p124
      %s127 = sadd.s32 %s126, 1
      %p130 = scmp.eq.s32.totalorder %s24, 3
      %p131 = scmp.ne.s32.totalorder %s126, %s128
      %p132 = scmp.eq.s32.totalorder %s24, 0
      %p133 = por %p131, %p132
      %p134 = scmp.ne.s32.totalorder %s126, %s128
      %p135 = scmp.eq.s32.totalorder %s29, 3
      %p136 = por %p134, %p135
      %p137 = scmp.ne.s32.totalorder %s128, %s129
      %p138 = scmp.eq.s32.totalorder %s29, 0
      %p139 = por %p137, %p138
      %p140 = scmp.ne.s32.totalorder %s128, %s129
      %p141 = scmp.eq.s32.totalorder %s30, 3
      %p142 = por %p140, %p141
      %p144 = scmp.ne.s32.totalorder %s129, %s143
      %p145 = scmp.eq.s32.totalorder %s30, 0
      %p146 = por %p144, %p145
      %s148 = sadd.s32 %s147, 1
      %p151 = scmp.eq.s32.totalorder %s24, 3
      %p152 = scmp.ne.s32.totalorder %s147, %s149
      %p153 = scmp.eq.s32.totalorder %s24, 0
      %p154 = por %p152, %p153
      %p155 = scmp.ne.s32.totalorder %s147, %s149
      %p156 = scmp.eq.s32.totalorder %s29, 3
      %p157 = por %p155, %p156
      %p158 = scmp.ne.s32.totalorder %s149, %s150
      %p159 = scmp.eq.s32.totalorder %s29, 0
      %p160 = por %p158, %p159
      %p161 = scmp.ne.s32.totalorder %s149, %s150
      %p162 = scmp.eq.s32.totalorder %s30, 3
      %p163 = por %p161, %p162
      %p165 = scmp.ne.s32.totalorder %s150, %s164
      %p166 = scmp.eq.s32.totalorder %s30, 0
      %p167 = por %p165, %p166
      %s169 = sadd.s32 %s168, 1
      %p172 = scmp.eq.s32.totalorder %s24, 3
      %p173 = scmp.ne.s32.totalorder %s168, %s170
      %p174 = scmp.eq.s32.totalorder %s24, 0
      %p175 = por %p173, %p174
      %p176 = scmp.ne.s32.totalorder %s168, %s170
      %p177 = scmp.eq.s32.totalorder %s29, 3
      %p178 = por %p176, %p177
      %p179 = scmp.ne.s32.totalorder %s170, %s171
      %p180 = scmp.eq.s32.totalorder %s29, 0
      %p181 = por %p179, %p180
      %p182 = scmp.ne.s32.totalorder %s170, %s171
      %p183 = scmp.eq.s32.totalorder %s30, 3
      %p184 = por %p182, %p183
      %p186 = scmp.ne.s32.totalorder %s171, %s185
      %p187 = scmp.eq.s32.totalorder %s30, 0
      %p188 = por %p186, %p187
      %s190 = sadd.s32 %s189, 1
      %p193 = scmp.eq.s32.totalorder %s24, 3
      %p194 = scmp.ne.s32.totalorder %s189, %s191
      %p195 = scmp.eq.s32.totalorder %s24, 0
      %p196 = por %p194, %p195
      %p197 = scmp.ne.s32.totalorder %s189, %s191
      %p198 = scmp.eq.s32.totalorder %s29, 3
      %p199 = por %p197, %p198
      %p200 = scmp.ne.s32.totalorder %s191, %s192
      %p201 = scmp.eq.s32.totalorder %s29, 0
      %p202 = por %p200, %p201
      %p203 = scmp.ne.s32.totalorder %s191, %s192
      %p204 = scmp.eq.s32.totalorder %s30, 3
      %p205 = por %p203, %p204
      %p207 = scmp.ne.s32.totalorder %s192, %s206
      %p208 = scmp.eq.s32.totalorder %s30, 0
      %p209 = por %p207, %p208
      %s210 = ssub.s32 %s24, %s31
      %p211 = scmp.eq.s32.totalorder %s210, 0
      %s213 = sadd.s32 %s212, 1
      %s214 = scalar_select %p211, %s212, %s213
      %p217 = pneg %p211
      %p218 = scmp.eq.s32.totalorder %s24, 3
      %p219 = por %p217, %p218
      %p220 = scmp.ne.s32.totalorder %s212, %s215
      %p221 = scmp.eq.s32.totalorder %s24, 0
      %p222 = por %p220, %p221
      %p223 = scmp.ne.s32.totalorder %s212, %s215
      %p224 = scmp.eq.s32.totalorder %s29, 3
      %p225 = por %p223, %p224
      %p226 = scmp.ne.s32.totalorder %s215, %s216
      %p227 = scmp.eq.s32.totalorder %s29, 0
      %p228 = por %p226, %p227
      %p229 = scmp.ne.s32.totalorder %s215, %s216
      %p230 = scmp.eq.s32.totalorder %s30, 3
      %p231 = por %p229, %p230
      %p233 = scmp.ne.s32.totalorder %s216, %s232
      %p234 = scmp.eq.s32.totalorder %s30, 0
      %p235 = por %p233, %p234
      %p236 = scmp.le.s32.totalorder 1, %s24
      %p237 = scmp.lt.s32.totalorder %s24, 5
      %p238 = pnand %p236, %p237
      %p239 = pneg %p238
      // Predicated region
      $region9: #{gat_forward_pallas.1} parent=5 // pred_check
        _
      $region10: #{gat_forward_pallas.1} parent=5 // pred_check_branch
        %241 = sbr.rel (%p238) target = $region12
      $region11: #{gat_forward_pallas.1} parent=5 // pred_region
        %s242 = ssub.s32 %s24, 1
        // Predicated region
        $region13: #{gat_forward_pallas.1} parent=11 // pred_check
          %p243 = pneg %p97
        $region14: #{gat_forward_pallas.1} parent=11 // pred_check_branch
          %245 = sbr.rel (%p243) target = $region16
        $region15: #{gat_forward_pallas.1} parent=11 // pred_region
          %s247 = ssub.s32 6144, 6144
          %248 = vsyncadd [#allocation6], %s247
          %s249 = sshll.u32 [#allocation7], 4
          %s250 = int_to_ptr.vmem [resolvable:$true] %s249
          %255 = dma.hbm_to_vmem [thread:$0]  %s2, 6144, %s250, [#allocation6], 384, 384, 24
        $region16: #{gat_forward_pallas.1} parent=11 // pred_fallthru
          _
        // Predicated region
        $region17: #{gat_forward_pallas.1} parent=11 // pred_check
          %p256 = pneg %p118
        $region18: #{gat_forward_pallas.1} parent=11 // pred_check_branch
          %258 = sbr.rel (%p256) target = $region20
        $region19: #{gat_forward_pallas.1} parent=11 // pred_region
          _
        $region20: #{gat_forward_pallas.1} parent=11 // pred_fallthru
          _
        // Predicated region
        $region21: #{gat_forward_pallas.1} parent=11 // pred_check
          %p259 = pneg %p139
        $region22: #{gat_forward_pallas.1} parent=11 // pred_check_branch
          %261 = sbr.rel (%p259) target = $region24
        $region23: #{gat_forward_pallas.1} parent=11 // pred_region
          %s263 = ssub.s32 64, 64
          %264 = vsyncadd [#allocation9], %s263
          %s266 = sshll.u32 [#allocation8], 4
          %s267 = int_to_ptr.vmem [resolvable:$true] %s266
          %269 = dma.hbm_to_vmem [thread:$0]  %s4, 64, %s267, [#allocation9]
        $region24: #{gat_forward_pallas.1} parent=11 // pred_fallthru
          _
        // Predicated region
        $region25: #{gat_forward_pallas.1} parent=11 // pred_check
          %p270 = pneg %p160
        $region26: #{gat_forward_pallas.1} parent=11 // pred_check_branch
          %272 = sbr.rel (%p270) target = $region28
        $region27: #{gat_forward_pallas.1} parent=11 // pred_region
          _
        $region28: #{gat_forward_pallas.1} parent=11 // pred_fallthru
          _
        // Predicated region
        $region29: #{gat_forward_pallas.1} parent=11 // pred_check
          %p273 = pneg %p181
        $region30: #{gat_forward_pallas.1} parent=11 // pred_check_branch
          %275 = sbr.rel (%p273) target = $region32
        $region31: #{gat_forward_pallas.1} parent=11 // pred_region
          %s277 = ssub.s32 1024, 1024
          %278 = vsyncadd [#allocation9], %s277
          %s279 = sshll.u32 [#allocation10], 4
          %s280 = int_to_ptr.vmem [resolvable:$true] %s279
          %285 = dma.hbm_to_vmem [thread:$0]  %s6, 1024, %s280, [#allocation9], 64, 64, 4
        $region32: #{gat_forward_pallas.1} parent=11 // pred_fallthru
          _
        // Predicated region
        $region33: #{gat_forward_pallas.1} parent=11 // pred_check
          %p286 = pneg %p202
        $region34: #{gat_forward_pallas.1} parent=11 // pred_check_branch
          %288 = sbr.rel (%p286) target = $region36
        $region35: #{gat_forward_pallas.1} parent=11 // pred_region
          _
        $region36: #{gat_forward_pallas.1} parent=11 // pred_fallthru
          _
      $region12: #{gat_forward_pallas.1} parent=5 // pred_fallthru
        _
      %p289 = scmp.lt.s32.totalorder %s24, 4
      // Predicated region
      $region37: #{gat_forward_pallas.1} parent=5 // pred_check
        %p290 = pneg %p289
      $region38: #{gat_forward_pallas.1} parent=5 // pred_check_branch
        %292 = sbr.rel (%p290) target = $region40
      $region39: #{gat_forward_pallas.1} parent=5 // pred_region
        // Predicated region
        $region41: #{gat_forward_pallas.1} parent=39 // pred_check
          %p293 = pneg %p44
        $region42: #{gat_forward_pallas.1} parent=39 // pred_check_branch
          %295 = sbr.rel (%p293) target = $region44
        $region43: #{gat_forward_pallas.1} parent=39 // pred_region
          %s296 = sand.u32 %s34, 1
          %s297 = scalar_lea.sflag [#allocation3], %s296
          %s298 = sand.u32 %s34, 1
          %s299 = smul.addr %s298, 8
          %s300 = scalar_lea.vmem [#allocation2], %s299
          %s302 = ssub.s32 128, 128
          %303 = vsyncadd %s297, %s302
          %s304 = smul.addr %s24, 2
          %s305 = smul.addr %s304, 64
          %s306 = scalar_lea.hbm %s0, %s305
          %s307 = sshll.u32 %s300, 4
          %s308 = int_to_ptr.vmem [resolvable:$true] %s307
          %313 = dma.hbm_to_vmem [thread:$0]  %s306, 128, %s308, %s297, 64, 64, 4
        $region44: #{gat_forward_pallas.1} parent=39 // pred_fallthru
          _
        // Predicated region
        $region45: #{gat_forward_pallas.1} parent=39 // pred_check
          %p314 = pneg %p70
        $region46: #{gat_forward_pallas.1} parent=39 // pred_check_branch
          %316 = sbr.rel (%p314) target = $region48
        $region47: #{gat_forward_pallas.1} parent=39 // pred_region
          %s317 = sand.u32 %s24, 1
          %s318 = scalar_lea.sflag [#allocation6], %s317
          %s319 = sand.u32 %s60, 1
          %s320 = smul.addr %s319, 16
          %s321 = scalar_lea.vmem [#allocation5], %s320
          %s323 = ssub.s32 256, 256
          %324 = vsyncadd %s318, %s323
          %s325 = smul.addr %s24, 2
          %s326 = smul.addr %s325, 128
          %s327 = scalar_lea.hbm %s1, %s326
          %s328 = sshll.u32 %s321, 4
          %s329 = int_to_ptr.vmem [resolvable:$true] %s328
          %334 = dma.hbm_to_vmem [thread:$0]  %s327, 256, %s329, %s318, 128, 128, 8
        $region48: #{gat_forward_pallas.1} parent=39 // pred_fallthru
          _
      $region40: #{gat_forward_pallas.1} parent=5 // pred_fallthru
        _
      %p335 = scmp.le.s32.totalorder 1, %s24
      %p336 = scmp.lt.s32.totalorder %s24, 5
      %p337 = pnand %p335, %p336
      %p338 = pneg %p337
      // Predicated region
      $region49: #{gat_forward_pallas.1} parent=5 // pred_check
        _
      $region50: #{gat_forward_pallas.1} parent=5 // pred_check_branch
        %340 = sbr.rel (%p337) target = $region52
      $region51: #{gat_forward_pallas.1} parent=5 // pred_region
        %s341 = ssub.s32 %s24, 1
        %s342 = sand.u32 %s37, 1
        %s343 = scalar_lea.sflag [#allocation3], %s342
        %s344 = sand.u32 %s37, 1
        %s345 = smul.addr %s344, 8
        %s346 = scalar_lea.vmem [#allocation2], %s345
        // Predicated region
        $region53: #{gat_forward_pallas.1} parent=51 // pred_check
          %p347 = pneg %p50
        $region54: #{gat_forward_pallas.1} parent=51 // pred_check_branch
          %349 = sbr.rel (%p347) target = $region56
        $region55: #{gat_forward_pallas.1} parent=51 // pred_region
          %350 = dma.done %s343, 128
        $region56: #{gat_forward_pallas.1} parent=51 // pred_fallthru
          _
        %s351 = sand.u32 %s29, 1
        %s352 = scalar_lea.sflag [#allocation6], %s351
        %s353 = sand.u32 %s63, 1
        %s354 = smul.addr %s353, 16
        %s355 = scalar_lea.vmem [#allocation5], %s354
        // Predicated region
        $region57: #{gat_forward_pallas.1} parent=51 // pred_check
          %p356 = pneg %p76
        $region58: #{gat_forward_pallas.1} parent=51 // pred_check_branch
          %358 = sbr.rel (%p356) target = $region60
        $region59: #{gat_forward_pallas.1} parent=51 // pred_region
          %359 = dma.done %s352, 256
        $region60: #{gat_forward_pallas.1} parent=51 // pred_fallthru
          _
        // Predicated region
        $region61: #{gat_forward_pallas.1} parent=51 // pred_check
          %p360 = pneg %p97
        $region62: #{gat_forward_pallas.1} parent=51 // pred_check_branch
          %362 = sbr.rel (%p360) target = $region64
        $region63: #{gat_forward_pallas.1} parent=51 // pred_region
          %363 = dma.done [#allocation6], 6144
        $region64: #{gat_forward_pallas.1} parent=51 // pred_fallthru
          _
        // Predicated region
        $region65: #{gat_forward_pallas.1} parent=51 // pred_check
          %p364 = pneg %p139
        $region66: #{gat_forward_pallas.1} parent=51 // pred_check_branch
          %366 = sbr.rel (%p364) target = $region68
        $region67: #{gat_forward_pallas.1} parent=51 // pred_region
          %367 = dma.done [#allocation9], 64
        $region68: #{gat_forward_pallas.1} parent=51 // pred_fallthru
          _
        // Predicated region
        $region69: #{gat_forward_pallas.1} parent=51 // pred_check
          %p368 = pneg %p181
        $region70: #{gat_forward_pallas.1} parent=51 // pred_check_branch
          %370 = sbr.rel (%p368) target = $region72
        $region71: #{gat_forward_pallas.1} parent=51 // pred_region
          %371 = dma.done [#allocation9], 1024
        $region72: #{gat_forward_pallas.1} parent=51 // pred_fallthru
          _
        %s372 = sand.u32 %s37, 1
        %s373 = scalar_lea.sflag [#allocation3], %s372
        %s374 = sand.u32 %s37, 1
        %s375 = smul.addr %s374, 8
        %s376 = scalar_lea.vmem [#allocation2], %s375
        %p377 = pneg %p50
        %p378 = pneg %p47
        %s379 = sand.u32 %s29, 1
        %s380 = scalar_lea.sflag [#allocation6], %s379
        %s381 = sand.u32 %s63, 1
        %s382 = smul.addr %s381, 16
        %s383 = scalar_lea.vmem [#allocation5], %s382
        %p384 = pneg %p76
        %p385 = pneg %p73
        %p386 = pneg %p97
        %p387 = pneg %p94
        %p388 = pneg %p118
        %p389 = pneg %p115
        %p390 = pneg %p139
        %p391 = pneg %p136
        %p392 = pneg %p160
        %p393 = pneg %p157
        %p394 = pneg %p181
        %p395 = pneg %p178
        %p396 = pneg %p202
        %p397 = pneg %p199
        %p398 = pneg %p228
        %p399 = pneg %p225
        %s400 = sand.u32 %s215, 1
        %s401 = scalar_lea.sflag [#allocation4], %s400
        %s402 = sand.u32 %s215, 1
        %s403 = smul.addr %s402, 16
        %s404 = scalar_lea.vmem [#allocation11], %s403
        %v406 = vld [vmem:[%s346] sm:$0xf]
        %v407 = vld [vmem:[%s346 + $0x4] sm:$0xf]
        %v408 = vld [vmem:[%s355] sm:$0xff]
        %v409 = vld [vmem:[%s355 + $0x8] sm:$0xff]
        %v410 = vld [vmem:[#allocation8] sm:$0x7]
        %v411 = vld [vmem:[#allocation7] sm:$0xff]
        %v412 = vld [vmem:[#allocation7 + $0x8] sm:$0xff]
        %v413 = vld [vmem:[#allocation7 + $0x10] sm:$0xff]
        %v414 = vld [vmem:[#allocation7 + $0x18] sm:$0xff]
        %v415 = vld [vmem:[#allocation7 + $0x20] sm:$0xff]
        %v416 = vld [vmem:[#allocation7 + $0x28] sm:$0xff]
        %v417 = vld [vmem:[#allocation7 + $0x30] sm:$0xff]
        %v418 = vld [vmem:[#allocation7 + $0x38] sm:$0xff]
        %v419 = vld [vmem:[#allocation7 + $0x40] sm:$0xff]
        %v420 = vld [vmem:[#allocation7 + $0x48] sm:$0xff]
        %v421 = vld [vmem:[#allocation7 + $0x50] sm:$0xff]
        %v422 = vld [vmem:[#allocation7 + $0x58] sm:$0xff]
        %v423 = vld [vmem:[#allocation7 + $0x60] sm:$0xff]
        %v424 = vld [vmem:[#allocation7 + $0x68] sm:$0xff]
        %v425 = vld [vmem:[#allocation7 + $0x70] sm:$0xff]
        %v426 = vld [vmem:[#allocation7 + $0x78] sm:$0xff]
        %v427 = vld [vmem:[#allocation7 + $0x80] sm:$0xff]
        %v428 = vld [vmem:[#allocation7 + $0x88] sm:$0xff]
        %v429 = vld [vmem:[#allocation7 + $0x90] sm:$0xff]
        %v430 = vld [vmem:[#allocation7 + $0x98] sm:$0xff]
        %v431 = vld [vmem:[#allocation7 + $0xa0] sm:$0xff]
        %v432 = vld [vmem:[#allocation7 + $0xa8] sm:$0xff]
        %v433 = vld [vmem:[#allocation7 + $0xb0] sm:$0xff]
        %v434 = vld [vmem:[#allocation7 + $0xb8] sm:$0xff]
        %v435 = vld [vmem:[#allocation7 + $0xc0] sm:$0xff]
        %v436 = vld [vmem:[#allocation7 + $0xc8] sm:$0xff]
        %v437 = vld [vmem:[#allocation7 + $0xd0] sm:$0xff]
        %v438 = vld [vmem:[#allocation7 + $0xd8] sm:$0xff]
        %v439 = vld [vmem:[#allocation7 + $0xe0] sm:$0xff]
        %v440 = vld [vmem:[#allocation7 + $0xe8] sm:$0xff]
        %v441 = vld [vmem:[#allocation7 + $0xf0] sm:$0xff]
        %v442 = vld [vmem:[#allocation7 + $0xf8] sm:$0xff]
        %v443 = vld [vmem:[#allocation7 + $0x100] sm:$0xff]
        %v444 = vld [vmem:[#allocation7 + $0x108] sm:$0xff]
        %v445 = vld [vmem:[#allocation7 + $0x110] sm:$0xff]
        %v446 = vld [vmem:[#allocation7 + $0x118] sm:$0xff]
        %v447 = vld [vmem:[#allocation7 + $0x120] sm:$0xff]
        %v448 = vld [vmem:[#allocation7 + $0x128] sm:$0xff]
        %v449 = vld [vmem:[#allocation7 + $0x130] sm:$0xff]
        %v450 = vld [vmem:[#allocation7 + $0x138] sm:$0xff]
        %v451 = vld [vmem:[#allocation7 + $0x140] sm:$0xff]
        %v452 = vld [vmem:[#allocation7 + $0x148] sm:$0xff]
        %v453 = vld [vmem:[#allocation7 + $0x150] sm:$0xff]
        %v454 = vld [vmem:[#allocation7 + $0x158] sm:$0xff]
        %v455 = vld [vmem:[#allocation7 + $0x160] sm:$0xff]
        %v456 = vld [vmem:[#allocation7 + $0x168] sm:$0xff]
        %v457 = vld [vmem:[#allocation7 + $0x170] sm:$0xff]
        %v458 = vld [vmem:[#allocation7 + $0x178] sm:$0xff]
        %v459 = vld [vmem:[%s3] sm:$0x3f]
        %v461 = vlaneseq
        %v462 = vshrl.u32 %v461, 7
        %v463 = vsub.s32 0, %v462
        %v464 = vrot.slane %v459, %v463
        %v465 = vlaneseq
        %v466 = vshrl.u32 %v465, 7
        %v467 = vsub.s32 1, %v466
        %v468 = vrot.slane %v459, %v467
        %v469 = vlaneseq
        %v470 = vshrl.u32 %v469, 7
        %v471 = vsub.s32 2, %v470
        %v472 = vrot.slane %v459, %v471
        %v473 = vlaneseq
        %v474 = vshrl.u32 %v473, 7
        %v475 = vsub.s32 3, %v474
        %v476 = vrot.slane %v459, %v475
        %v477 = vlaneseq
        %v478 = vshrl.u32 %v477, 7
        %v479 = vsub.s32 4, %v478
        %v480 = vrot.slane %v459, %v479
        %v481 = vlaneseq
        %v482 = vshrl.u32 %v481, 7
        %v483 = vsub.s32 5, %v482
        %v484 = vrot.slane %v459, %v483
        %v493 = vunpack.c.l.b16 %v406
        %v494 = vunpack.c.l.b16 %v407
        %v495 = vpack.c.b16 %v494, %v493
        %v545 = vunpack.c.l.b16 %v411
        %v546 = vunpack.c.h.b16 %v411
        %v547 = vunpack.c.l.b16 %v412
        %v548 = vunpack.c.h.b16 %v412
        %v549 = vunpack.c.l.b16 %v413
        %v550 = vunpack.c.h.b16 %v413
        %v551 = vunpack.c.l.b16 %v414
        %v552 = vunpack.c.h.b16 %v414
        %v553 = vunpack.c.l.b16 %v415
        %v554 = vunpack.c.h.b16 %v415
        %v555 = vunpack.c.l.b16 %v416
        %v556 = vunpack.c.h.b16 %v416
        %v557 = vunpack.c.l.b16 %v417
        %v558 = vunpack.c.h.b16 %v417
        %v559 = vunpack.c.l.b16 %v418
        %v560 = vunpack.c.h.b16 %v418
        %v561 = vunpack.c.l.b16 %v419
        %v562 = vunpack.c.h.b16 %v419
        %v563 = vunpack.c.l.b16 %v420
        %v564 = vunpack.c.h.b16 %v420
        %v565 = vunpack.c.l.b16 %v421
        %v566 = vunpack.c.h.b16 %v421
        %v567 = vunpack.c.l.b16 %v422
        %v568 = vunpack.c.h.b16 %v422
        %v569 = vunpack.c.l.b16 %v423
        %v570 = vunpack.c.h.b16 %v423
        %v571 = vunpack.c.l.b16 %v424
        %v572 = vunpack.c.h.b16 %v424
        %v573 = vunpack.c.l.b16 %v425
        %v574 = vunpack.c.h.b16 %v425
        %v575 = vunpack.c.l.b16 %v426
        %v576 = vunpack.c.h.b16 %v426
        %v577 = vunpack.c.l.b16 %v427
        %v578 = vunpack.c.h.b16 %v427
        %v579 = vunpack.c.l.b16 %v428
        %v580 = vunpack.c.h.b16 %v428
        %v581 = vunpack.c.l.b16 %v429
        %v582 = vunpack.c.h.b16 %v429
        %v583 = vunpack.c.l.b16 %v430
        %v584 = vunpack.c.h.b16 %v430
        %v585 = vunpack.c.l.b16 %v431
        %v586 = vunpack.c.h.b16 %v431
        %v587 = vunpack.c.l.b16 %v432
        %v588 = vunpack.c.h.b16 %v432
        %v589 = vunpack.c.l.b16 %v433
        %v590 = vunpack.c.h.b16 %v433
        %v591 = vunpack.c.l.b16 %v434
        %v592 = vunpack.c.h.b16 %v434
        %v593 = vunpack.c.l.b16 %v435
        %v594 = vunpack.c.h.b16 %v435
        %v595 = vunpack.c.l.b16 %v436
        %v596 = vunpack.c.h.b16 %v436
        %v597 = vunpack.c.l.b16 %v437
        %v598 = vunpack.c.h.b16 %v437
        %v599 = vunpack.c.l.b16 %v438
        %v600 = vunpack.c.h.b16 %v438
        %v601 = vunpack.c.l.b16 %v439
        %v602 = vunpack.c.h.b16 %v439
        %v603 = vunpack.c.l.b16 %v440
        %v604 = vunpack.c.h.b16 %v440
        %v605 = vunpack.c.l.b16 %v441
        %v606 = vunpack.c.h.b16 %v441
        %v607 = vunpack.c.l.b16 %v442
        %v608 = vunpack.c.h.b16 %v442
        %v609 = vunpack.c.l.b16 %v443
        %v610 = vunpack.c.h.b16 %v443
        %v611 = vunpack.c.l.b16 %v444
        %v612 = vunpack.c.h.b16 %v444
        %v613 = vunpack.c.l.b16 %v445
        %v614 = vunpack.c.h.b16 %v445
        %v615 = vunpack.c.l.b16 %v446
        %v616 = vunpack.c.h.b16 %v446
        %v617 = vunpack.c.l.b16 %v447
        %v618 = vunpack.c.h.b16 %v447
        %v619 = vunpack.c.l.b16 %v448
        %v620 = vunpack.c.h.b16 %v448
        %v621 = vunpack.c.l.b16 %v449
        %v622 = vunpack.c.h.b16 %v449
        %v623 = vunpack.c.l.b16 %v450
        %v624 = vunpack.c.h.b16 %v450
        %v625 = vunpack.c.l.b16 %v451
        %v626 = vunpack.c.h.b16 %v451
        %v627 = vunpack.c.l.b16 %v452
        %v628 = vunpack.c.h.b16 %v452
        %v629 = vunpack.c.l.b16 %v453
        %v630 = vunpack.c.h.b16 %v453
        %v631 = vunpack.c.l.b16 %v454
        %v632 = vunpack.c.h.b16 %v454
        %v633 = vunpack.c.l.b16 %v455
        %v634 = vunpack.c.h.b16 %v455
        %v635 = vunpack.c.l.b16 %v456
        %v636 = vunpack.c.h.b16 %v456
        %v637 = vunpack.c.l.b16 %v457
        %v638 = vunpack.c.h.b16 %v457
        %v639 = vunpack.c.l.b16 %v458
        %v640 = vunpack.c.h.b16 %v458
        %v641 = vpack.c.b16 %v551, %v545
        %v642 = vpack.c.b16 %v552, %v546
        %v643 = vpack.c.b16 %v553, %v547
        %v644 = vpack.c.b16 %v554, %v548
        %v645 = vpack.c.b16 %v555, %v549
        %v646 = vpack.c.b16 %v556, %v550
        %v647 = vpack.c.b16 %v563, %v557
        %v648 = vpack.c.b16 %v564, %v558
        %v649 = vpack.c.b16 %v565, %v559
        %v650 = vpack.c.b16 %v566, %v560
        %v651 = vpack.c.b16 %v567, %v561
        %v652 = vpack.c.b16 %v568, %v562
        %v653 = vpack.c.b16 %v575, %v569
        %v654 = vpack.c.b16 %v576, %v570
        %v655 = vpack.c.b16 %v577, %v571
        %v656 = vpack.c.b16 %v578, %v572
        %v657 = vpack.c.b16 %v579, %v573
        %v658 = vpack.c.b16 %v580, %v574
        %v659 = vpack.c.b16 %v587, %v581
        %v660 = vpack.c.b16 %v588, %v582
        %v661 = vpack.c.b16 %v589, %v583
        %v662 = vpack.c.b16 %v590, %v584
        %v663 = vpack.c.b16 %v591, %v585
        %v664 = vpack.c.b16 %v592, %v586
        %v665 = vpack.c.b16 %v599, %v593
        %v666 = vpack.c.b16 %v600, %v594
        %v667 = vpack.c.b16 %v601, %v595
        %v668 = vpack.c.b16 %v602, %v596
        %v669 = vpack.c.b16 %v603, %v597
        %v670 = vpack.c.b16 %v604, %v598
        %v671 = vpack.c.b16 %v611, %v605
        %v672 = vpack.c.b16 %v612, %v606
        %v673 = vpack.c.b16 %v613, %v607
        %v674 = vpack.c.b16 %v614, %v608
        %v675 = vpack.c.b16 %v615, %v609
        %v676 = vpack.c.b16 %v616, %v610
        %v677 = vpack.c.b16 %v623, %v617
        %v678 = vpack.c.b16 %v624, %v618
        %v679 = vpack.c.b16 %v625, %v619
        %v680 = vpack.c.b16 %v626, %v620
        %v681 = vpack.c.b16 %v627, %v621
        %v682 = vpack.c.b16 %v628, %v622
        %v683 = vpack.c.b16 %v635, %v629
        %v684 = vpack.c.b16 %v636, %v630
        %v685 = vpack.c.b16 %v637, %v631
        %v686 = vpack.c.b16 %v638, %v632
        %v687 = vpack.c.b16 %v639, %v633
        %v688 = vpack.c.b16 %v640, %v634
        %737 = vmatprep.subr.bf16.mxu0 %v684
        %738 = vmatpush1.bf16.msra.mxu0 %v683
        %739 = vmatprep.subr.bf16.mxu0 %v678
        %740 = vmatpush1.bf16.msra.mxu0 %v677
        %741 = vmatprep.subr.bf16.mxu0 %v672
        %742 = vmatpush1.bf16.msra.mxu0 %v671
        %743 = vmatprep.subr.bf16.mxu0 %v666
        %744 = vmatpush1.bf16.msra.mxu0 %v665
        %745 = vmatprep.subr.bf16.mxu0 %v660
        %746 = vmatpush1.bf16.msra.mxu0 %v659
        %747 = vmatprep.subr.bf16.mxu0 %v654
        %748 = vmatpush1.bf16.msra.mxu0 %v653
        %749 = vmatprep.subr.bf16.mxu0 %v648
        %750 = vmatpush1.bf16.msra.mxu0 %v647
        %751 = vmatprep.subr.bf16.mxu0 %v642
        %752 = vmatpush1.bf16.msra.mxu0 %v641
        %753 = vmatprep.subr.bf16.mxu0 0
        %754 = vmatpush2.bf16.msra.mxu0 0
        %755 = vmatprep.subr.bf16.mxu0 0
        %756 = vmatpush2.bf16.msra.mxu0 0
        %757 = vmatprep.subr.bf16.mxu0 0
        %758 = vmatpush2.bf16.msra.mxu0 0
        %759 = vmatprep.subr.bf16.mxu0 0
        %760 = vmatpush2.bf16.msra.mxu0 0
        %761 = vmatprep.subr.bf16.mxu0 0
        %762 = vmatpush2.bf16.msra.mxu0 0
        %763 = vmatprep.subr.bf16.mxu0 0
        %764 = vmatpush2.bf16.msra.mxu0 0
        %765 = vmatprep.subr.bf16.mxu0 0
        %766 = vmatpush2.bf16.msra.mxu0 0
        %767 = vmatprep.subr.bf16.mxu0 0
        %768 = vmatpush2.bf16.msra.mxu0 0
        %769 = vmatprep.mubr.bf16.mxu0 0
        %770 = vmatmul.mubr.bf16.gmra.mxu0 %v495
        %v771 = vpop.f32.mrf.mxu0
        %v772 = vadd.f32 %v464, %v771
        %v773 = vpop.f32.mrf.mxu0
        %v774 = vadd.f32 %v468, %v773
        %v775 = vpop.f32.mrf.mxu0
        %v776 = vadd.f32 %v464, %v775
        %v777 = vpop.f32.mrf.mxu0
        %v778 = vadd.f32 %v468, %v777
        %779 = vdwg.mxu0
        %780 = vmatprep.subr.bf16.mxu0 %v686
        %781 = vmatpush1.bf16.msra.mxu0 %v685
        %782 = vmatprep.subr.bf16.mxu0 %v680
        %783 = vmatpush1.bf16.msra.mxu0 %v679
        %784 = vmatprep.subr.bf16.mxu0 %v674
        %785 = vmatpush1.bf16.msra.mxu0 %v673
        %786 = vmatprep.subr.bf16.mxu0 %v668
        %787 = vmatpush1.bf16.msra.mxu0 %v667
        %788 = vmatprep.subr.bf16.mxu0 %v662
        %789 = vmatpush1.bf16.msra.mxu0 %v661
        %790 = vmatprep.subr.bf16.mxu0 %v656
        %791 = vmatpush1.bf16.msra.mxu0 %v655
        %792 = vmatprep.subr.bf16.mxu0 %v650
        %793 = vmatpush1.bf16.msra.mxu0 %v649
        %794 = vmatprep.subr.bf16.mxu0 %v644
        %795 = vmatpush1.bf16.msra.mxu0 %v643
        %796 = vmatprep.subr.bf16.mxu0 0
        %797 = vmatpush2.bf16.msra.mxu0 0
        %798 = vmatprep.subr.bf16.mxu0 0
        %799 = vmatpush2.bf16.msra.mxu0 0
        %800 = vmatprep.subr.bf16.mxu0 0
        %801 = vmatpush2.bf16.msra.mxu0 0
        %802 = vmatprep.subr.bf16.mxu0 0
        %803 = vmatpush2.bf16.msra.mxu0 0
        %804 = vmatprep.subr.bf16.mxu0 0
        %805 = vmatpush2.bf16.msra.mxu0 0
        %806 = vmatprep.subr.bf16.mxu0 0
        %807 = vmatpush2.bf16.msra.mxu0 0
        %808 = vmatprep.subr.bf16.mxu0 0
        %809 = vmatpush2.bf16.msra.mxu0 0
        %810 = vmatprep.subr.bf16.mxu0 0
        %811 = vmatpush2.bf16.msra.mxu0 0
        %812 = vmatprep.mubr.bf16.mxu0 0
        %813 = vmatmul.mubr.bf16.gmra.mxu0 %v495
        %v814 = vpop.f32.mrf.mxu0
        %v815 = vadd.f32 %v472, %v814
        %v816 = vpop.f32.mrf.mxu0
        %v817 = vadd.f32 %v476, %v816
        %v818 = vpop.f32.mrf.mxu0
        %v819 = vadd.f32 %v472, %v818
        %v820 = vpop.f32.mrf.mxu0
        %v821 = vadd.f32 %v476, %v820
        %822 = vdwg.mxu0
        %823 = vmatprep.subr.bf16.mxu0 %v688
        %824 = vmatpush1.bf16.msra.mxu0 %v687
        %825 = vmatprep.subr.bf16.mxu0 %v682
        %826 = vmatpush1.bf16.msra.mxu0 %v681
        %827 = vmatprep.subr.bf16.mxu0 %v676
        %828 = vmatpush1.bf16.msra.mxu0 %v675
        %829 = vmatprep.subr.bf16.mxu0 %v670
        %830 = vmatpush1.bf16.msra.mxu0 %v669
        %831 = vmatprep.subr.bf16.mxu0 %v664
        %832 = vmatpush1.bf16.msra.mxu0 %v663
        %833 = vmatprep.subr.bf16.mxu0 %v658
        %834 = vmatpush1.bf16.msra.mxu0 %v657
        %835 = vmatprep.subr.bf16.mxu0 %v652
        %836 = vmatpush1.bf16.msra.mxu0 %v651
        %837 = vmatprep.subr.bf16.mxu0 %v646
        %838 = vmatpush1.bf16.msra.mxu0 %v645
        %839 = vmatprep.subr.bf16.mxu0 0
        %840 = vmatpush2.bf16.msra.mxu0 0
        %841 = vmatprep.subr.bf16.mxu0 0
        %842 = vmatpush2.bf16.msra.mxu0 0
        %843 = vmatprep.subr.bf16.mxu0 0
        %844 = vmatpush2.bf16.msra.mxu0 0
        %845 = vmatprep.subr.bf16.mxu0 0
        %846 = vmatpush2.bf16.msra.mxu0 0
        %847 = vmatprep.subr.bf16.mxu0 0
        %848 = vmatpush2.bf16.msra.mxu0 0
        %849 = vmatprep.subr.bf16.mxu0 0
        %850 = vmatpush2.bf16.msra.mxu0 0
        %851 = vmatprep.subr.bf16.mxu0 0
        %852 = vmatpush2.bf16.msra.mxu0 0
        %853 = vmatprep.subr.bf16.mxu0 0
        %854 = vmatpush2.bf16.msra.mxu0 0
        %855 = vmatprep.mubr.bf16.mxu0 0
        %856 = vmatmul.mubr.bf16.gmra.mxu0 %v495
        %v857 = vpop.f32.mrf.mxu0
        %v858 = vadd.f32 %v480, %v857
        %v859 = vpop.f32.mrf.mxu0
        %v860 = vadd.f32 %v484, %v859
        %v861 = vpop.f32.mrf.mxu0
        %v862 = vadd.f32 %v480, %v861
        %v863 = vpop.f32.mrf.mxu0
        %v864 = vadd.f32 %v484, %v863
        %865 = vdwg.mxu0
        %v868 = vcombine.high %v817, %v817
        %v870 = vunpack.c.l.s4 1966171168
        %v871 = vunpack.c.0.s8 %v870
        %v872 = vlaneseq
        %v873 = vshrl.u32 %v872, 7
        %v874 = vsub.s32 %v871, %v873
        %v875 = vrot.slane %v817, %v874
        %v877 = vunpack.c.l.s4 1966171168
        %v878 = vunpack.c.0.s8 %v877
        %v879 = vlaneseq
        %v880 = vshrl.u32 %v879, 7
        %v881 = vsub.s32 %v878, %v880
        %v882 = vrot.slane %v868, %v881
        %v883 = vcombine.high %v875, %v875
        %v884 = vcombine.high %v882, %v882
        %v886 = vunpack.c.l.s4 1966171168
        %v887 = vunpack.c.0.s8 %v886
        %v888 = vlaneseq
        %v889 = vshrl.u32 %v888, 7
        %v890 = vsub.s32 %v887, %v889
        %v891 = vrot.slane %v875, %v890
        %v893 = vunpack.c.l.s4 1966171168
        %v894 = vunpack.c.0.s8 %v893
        %v895 = vlaneseq
        %v896 = vshrl.u32 %v895, 7
        %v897 = vsub.s32 %v894, %v896
        %v898 = vrot.slane %v882, %v897
        %v900 = vunpack.c.l.s4 1966171168
        %v901 = vunpack.c.0.s8 %v900
        %v902 = vlaneseq
        %v903 = vshrl.u32 %v902, 7
        %v904 = vsub.s32 %v901, %v903
        %v905 = vrot.slane %v883, %v904
        %v907 = vunpack.c.l.s4 1966171168
        %v908 = vunpack.c.0.s8 %v907
        %v909 = vlaneseq
        %v910 = vshrl.u32 %v909, 7
        %v911 = vsub.s32 %v908, %v910
        %v912 = vrot.slane %v884, %v911
        %v913 = vcombine.high %v891, %v891
        %v914 = vcombine.high %v898, %v898
        %v915 = vcombine.high %v905, %v905
        %v916 = vcombine.high %v912, %v912
        %v917 = vcombine.high %v821, %v821
        %v919 = vunpack.c.l.s4 1966171168
        %v920 = vunpack.c.0.s8 %v919
        %v921 = vlaneseq
        %v922 = vshrl.u32 %v921, 7
        %v923 = vsub.s32 %v920, %v922
        %v924 = vrot.slane %v821, %v923
        %v926 = vunpack.c.l.s4 1966171168
        %v927 = vunpack.c.0.s8 %v926
        %v928 = vlaneseq
        %v929 = vshrl.u32 %v928, 7
        %v930 = vsub.s32 %v927, %v929
        %v931 = vrot.slane %v917, %v930
        %v932 = vcombine.high %v924, %v924
        %v933 = vcombine.high %v931, %v931
        %v935 = vunpack.c.l.s4 1966171168
        %v936 = vunpack.c.0.s8 %v935
        %v937 = vlaneseq
        %v938 = vshrl.u32 %v937, 7
        %v939 = vsub.s32 %v936, %v938
        %v940 = vrot.slane %v924, %v939
        %v942 = vunpack.c.l.s4 1966171168
        %v943 = vunpack.c.0.s8 %v942
        %v944 = vlaneseq
        %v945 = vshrl.u32 %v944, 7
        %v946 = vsub.s32 %v943, %v945
        %v947 = vrot.slane %v931, %v946
        %v949 = vunpack.c.l.s4 1966171168
        %v950 = vunpack.c.0.s8 %v949
        %v951 = vlaneseq
        %v952 = vshrl.u32 %v951, 7
        %v953 = vsub.s32 %v950, %v952
        %v954 = vrot.slane %v932, %v953
        %v956 = vunpack.c.l.s4 1966171168
        %v957 = vunpack.c.0.s8 %v956
        %v958 = vlaneseq
        %v959 = vshrl.u32 %v958, 7
        %v960 = vsub.s32 %v957, %v959
        %v961 = vrot.slane %v933, %v960
        %v962 = vcombine.high %v940, %v940
        %v963 = vcombine.high %v947, %v947
        %v964 = vcombine.high %v954, %v954
        %v965 = vcombine.high %v961, %v961
        %v966 = vlaneseq
        %v967 = vshrl.u32 %v966, 7
        %v968 = vsub.s32 0, %v967
        %v969 = vrot.slane %v891, %v968
        %v970 = vlaneseq
        %v971 = vshrl.u32 %v970, 7
        %v972 = vsub.s32 0, %v971
        %v973 = vrot.slane %v905, %v972
        %v974 = vlaneseq
        %v975 = vshrl.u32 %v974, 7
        %v976 = vsub.s32 0, %v975
        %v977 = vrot.slane %v913, %v976
        %v978 = vlaneseq
        %v979 = vshrl.u32 %v978, 7
        %v980 = vsub.s32 0, %v979
        %v981 = vrot.slane %v915, %v980
        %v982 = vlaneseq
        %v983 = vshrl.u32 %v982, 7
        %v984 = vsub.s32 0, %v983
        %v985 = vrot.slane %v898, %v984
        %v986 = vlaneseq
        %v987 = vshrl.u32 %v986, 7
        %v988 = vsub.s32 0, %v987
        %v989 = vrot.slane %v912, %v988
        %v990 = vlaneseq
        %v991 = vshrl.u32 %v990, 7
        %v992 = vsub.s32 0, %v991
        %v993 = vrot.slane %v914, %v992
        %v994 = vlaneseq
        %v995 = vshrl.u32 %v994, 7
        %v996 = vsub.s32 0, %v995
        %v997 = vrot.slane %v916, %v996
        %v998 = vlaneseq
        %v999 = vshrl.u32 %v998, 7
        %v1000 = vsub.s32 0, %v999
        %v1001 = vrot.slane %v940, %v1000
        %v1002 = vlaneseq
        %v1003 = vshrl.u32 %v1002, 7
        %v1004 = vsub.s32 0, %v1003
        %v1005 = vrot.slane %v954, %v1004
        %v1006 = vlaneseq
        %v1007 = vshrl.u32 %v1006, 7
        %v1008 = vsub.s32 0, %v1007
        %v1009 = vrot.slane %v962, %v1008
        %v1010 = vlaneseq
        %v1011 = vshrl.u32 %v1010, 7
        %v1012 = vsub.s32 0, %v1011
        %v1013 = vrot.slane %v964, %v1012
        %v1014 = vlaneseq
        %v1015 = vshrl.u32 %v1014, 7
        %v1016 = vsub.s32 0, %v1015
        %v1017 = vrot.slane %v947, %v1016
        %v1018 = vlaneseq
        %v1019 = vshrl.u32 %v1018, 7
        %v1020 = vsub.s32 0, %v1019
        %v1021 = vrot.slane %v961, %v1020
        %v1022 = vlaneseq
        %v1023 = vshrl.u32 %v1022, 7
        %v1024 = vsub.s32 0, %v1023
        %v1025 = vrot.slane %v963, %v1024
        %v1026 = vlaneseq
        %v1027 = vshrl.u32 %v1026, 7
        %v1028 = vsub.s32 0, %v1027
        %v1029 = vrot.slane %v965, %v1028
        %v1046 = vadd.f32 %v969, %v772
        %v1047 = vadd.f32 %v969, %v776
        %v1048 = vadd.f32 %v973, %v772
        %v1049 = vadd.f32 %v973, %v776
        %v1050 = vadd.f32 %v977, %v772
        %v1051 = vadd.f32 %v977, %v776
        %v1052 = vadd.f32 %v981, %v772
        %v1053 = vadd.f32 %v981, %v776
        %v1054 = vadd.f32 %v985, %v772
        %v1055 = vadd.f32 %v985, %v776
        %v1056 = vadd.f32 %v989, %v772
        %v1057 = vadd.f32 %v989, %v776
        %v1058 = vadd.f32 %v993, %v772
        %v1059 = vadd.f32 %v993, %v776
        %v1060 = vadd.f32 %v997, %v772
        %v1061 = vadd.f32 %v997, %v776
        %v1062 = vadd.f32 %v1001, %v772
        %v1063 = vadd.f32 %v1001, %v776
        %v1064 = vadd.f32 %v1005, %v772
        %v1065 = vadd.f32 %v1005, %v776
        %v1066 = vadd.f32 %v1009, %v772
        %v1067 = vadd.f32 %v1009, %v776
        %v1068 = vadd.f32 %v1013, %v772
        %v1069 = vadd.f32 %v1013, %v776
        %v1070 = vadd.f32 %v1017, %v772
        %v1071 = vadd.f32 %v1017, %v776
        %v1072 = vadd.f32 %v1021, %v772
        %v1073 = vadd.f32 %v1021, %v776
        %v1074 = vadd.f32 %v1025, %v772
        %v1075 = vadd.f32 %v1025, %v776
        %v1076 = vadd.f32 %v1029, %v772
        %v1077 = vadd.f32 %v1029, %v776
        %v1078 = vmul.f32 %v1046, 0.2
        %v1079 = vmul.f32 %v1047, 0.2
        %v1080 = vmul.f32 %v1048, 0.2
        %v1081 = vmul.f32 %v1049, 0.2
        %v1082 = vmul.f32 %v1050, 0.2
        %v1083 = vmul.f32 %v1051, 0.2
        %v1084 = vmul.f32 %v1052, 0.2
        %v1085 = vmul.f32 %v1053, 0.2
        %v1086 = vmul.f32 %v1054, 0.2
        %v1087 = vmul.f32 %v1055, 0.2
        %v1088 = vmul.f32 %v1056, 0.2
        %v1089 = vmul.f32 %v1057, 0.2
        %v1090 = vmul.f32 %v1058, 0.2
        %v1091 = vmul.f32 %v1059, 0.2
        %v1092 = vmul.f32 %v1060, 0.2
        %v1093 = vmul.f32 %v1061, 0.2
        %v1094 = vmul.f32 %v1062, 0.2
        %v1095 = vmul.f32 %v1063, 0.2
        %v1096 = vmul.f32 %v1064, 0.2
        %v1097 = vmul.f32 %v1065, 0.2
        %v1098 = vmul.f32 %v1066, 0.2
        %v1099 = vmul.f32 %v1067, 0.2
        %v1100 = vmul.f32 %v1068, 0.2
        %v1101 = vmul.f32 %v1069, 0.2
        %v1102 = vmul.f32 %v1070, 0.2
        %v1103 = vmul.f32 %v1071, 0.2
        %v1104 = vmul.f32 %v1072, 0.2
        %v1105 = vmul.f32 %v1073, 0.2
        %v1106 = vmul.f32 %v1074, 0.2
        %v1107 = vmul.f32 %v1075, 0.2
        %v1108 = vmul.f32 %v1076, 0.2
        %v1109 = vmul.f32 %v1077, 0.2
        %v1110 = vmax.f32 %v1046, %v1078
        %v1111 = vmax.f32 %v1047, %v1079
        %v1112 = vmax.f32 %v1048, %v1080
        %v1113 = vmax.f32 %v1049, %v1081
        %v1114 = vmax.f32 %v1050, %v1082
        %v1115 = vmax.f32 %v1051, %v1083
        %v1116 = vmax.f32 %v1052, %v1084
        %v1117 = vmax.f32 %v1053, %v1085
        %v1118 = vmax.f32 %v1054, %v1086
        %v1119 = vmax.f32 %v1055, %v1087
        %v1120 = vmax.f32 %v1056, %v1088
        %v1121 = vmax.f32 %v1057, %v1089
        %v1122 = vmax.f32 %v1058, %v1090
        %v1123 = vmax.f32 %v1059, %v1091
        %v1124 = vmax.f32 %v1060, %v1092
        %v1125 = vmax.f32 %v1061, %v1093
        %v1126 = vmax.f32 %v1062, %v1094
        %v1127 = vmax.f32 %v1063, %v1095
        %v1128 = vmax.f32 %v1064, %v1096
        %v1129 = vmax.f32 %v1065, %v1097
        %v1130 = vmax.f32 %v1066, %v1098
        %v1131 = vmax.f32 %v1067, %v1099
        %v1132 = vmax.f32 %v1068, %v1100
        %v1133 = vmax.f32 %v1069, %v1101
        %v1134 = vmax.f32 %v1070, %v1102
        %v1135 = vmax.f32 %v1071, %v1103
        %v1136 = vmax.f32 %v1072, %v1104
        %v1137 = vmax.f32 %v1073, %v1105
        %v1138 = vmax.f32 %v1074, %v1106
        %v1139 = vmax.f32 %v1075, %v1107
        %v1140 = vmax.f32 %v1076, %v1108
        %v1141 = vmax.f32 %v1077, %v1109
        %v1142 = vlaneseq
        %v1143 = vshrl.u32 %v1142, 7
        %v1144 = vsub.s32 0, %v1143
        %v1145 = vrot.slane %v410, %v1144
        %v1146 = vmul.f32 %v1110, %v1145
        %v1147 = vmul.f32 %v1111, %v1145
        %v1148 = vmul.f32 %v1112, %v1145
        %v1149 = vmul.f32 %v1113, %v1145
        %v1150 = vmul.f32 %v1114, %v1145
        %v1151 = vmul.f32 %v1115, %v1145
        %v1152 = vmul.f32 %v1116, %v1145
        %v1153 = vmul.f32 %v1117, %v1145
        %v1154 = vmul.f32 %v1118, %v1145
        %v1155 = vmul.f32 %v1119, %v1145
        %v1156 = vmul.f32 %v1120, %v1145
        %v1157 = vmul.f32 %v1121, %v1145
        %v1158 = vmul.f32 %v1122, %v1145
        %v1159 = vmul.f32 %v1123, %v1145
        %v1160 = vmul.f32 %v1124, %v1145
        %v1161 = vmul.f32 %v1125, %v1145
        %v1162 = vmul.f32 %v1126, %v1145
        %v1163 = vmul.f32 %v1127, %v1145
        %v1164 = vmul.f32 %v1128, %v1145
        %v1165 = vmul.f32 %v1129, %v1145
        %v1166 = vmul.f32 %v1130, %v1145
        %v1167 = vmul.f32 %v1131, %v1145
        %v1168 = vmul.f32 %v1132, %v1145
        %v1169 = vmul.f32 %v1133, %v1145
        %v1170 = vmul.f32 %v1134, %v1145
        %v1171 = vmul.f32 %v1135, %v1145
        %v1172 = vmul.f32 %v1136, %v1145
        %v1173 = vmul.f32 %v1137, %v1145
        %v1174 = vmul.f32 %v1138, %v1145
        %v1175 = vmul.f32 %v1139, %v1145
        %v1176 = vmul.f32 %v1140, %v1145
        %v1177 = vmul.f32 %v1141, %v1145
        %1178 = vadd.xlane.f32.xlu0 %v1146
        %v1179 = vpop.xlane.xlu0 %1178
        %1180 = vadd.xlane.f32.xlu0 %v1147
        %v1181 = vpop.xlane.xlu0 %1180
        %1182 = vadd.xlane.f32.xlu0 %v1148
        %v1183 = vpop.xlane.xlu0 %1182
        %1184 = vadd.xlane.f32.xlu0 %v1149
        %v1185 = vpop.xlane.xlu0 %1184
        %1186 = vadd.xlane.f32.xlu0 %v1150
        %v1187 = vpop.xlane.xlu0 %1186
        %1188 = vadd.xlane.f32.xlu0 %v1151
        %v1189 = vpop.xlane.xlu0 %1188
        %1190 = vadd.xlane.f32.xlu0 %v1152
        %v1191 = vpop.xlane.xlu0 %1190
        %1192 = vadd.xlane.f32.xlu0 %v1153
        %v1193 = vpop.xlane.xlu0 %1192
        %1194 = vadd.xlane.f32.xlu0 %v1154
        %v1195 = vpop.xlane.xlu0 %1194
        %1196 = vadd.xlane.f32.xlu0 %v1155
        %v1197 = vpop.xlane.xlu0 %1196
        %1198 = vadd.xlane.f32.xlu0 %v1156
        %v1199 = vpop.xlane.xlu0 %1198
        %1200 = vadd.xlane.f32.xlu0 %v1157
        %v1201 = vpop.xlane.xlu0 %1200
        %1202 = vadd.xlane.f32.xlu0 %v1158
        %v1203 = vpop.xlane.xlu0 %1202
        %1204 = vadd.xlane.f32.xlu0 %v1159
        %v1205 = vpop.xlane.xlu0 %1204
        %1206 = vadd.xlane.f32.xlu0 %v1160
        %v1207 = vpop.xlane.xlu0 %1206
        %1208 = vadd.xlane.f32.xlu0 %v1161
        %v1209 = vpop.xlane.xlu0 %1208
        %1210 = vadd.xlane.f32.xlu0 %v1162
        %v1211 = vpop.xlane.xlu0 %1210
        %1212 = vadd.xlane.f32.xlu0 %v1163
        %v1213 = vpop.xlane.xlu0 %1212
        %1214 = vadd.xlane.f32.xlu0 %v1164
        %v1215 = vpop.xlane.xlu0 %1214
        %1216 = vadd.xlane.f32.xlu0 %v1165
        %v1217 = vpop.xlane.xlu0 %1216
        %1218 = vadd.xlane.f32.xlu0 %v1166
        %v1219 = vpop.xlane.xlu0 %1218
        %1220 = vadd.xlane.f32.xlu0 %v1167
        %v1221 = vpop.xlane.xlu0 %1220
        %1222 = vadd.xlane.f32.xlu0 %v1168
        %v1223 = vpop.xlane.xlu0 %1222
        %1224 = vadd.xlane.f32.xlu0 %v1169
        %v1225 = vpop.xlane.xlu0 %1224
        %1226 = vadd.xlane.f32.xlu0 %v1170
        %v1227 = vpop.xlane.xlu0 %1226
        %1228 = vadd.xlane.f32.xlu0 %v1171
        %v1229 = vpop.xlane.xlu0 %1228
        %1230 = vadd.xlane.f32.xlu0 %v1172
        %v1231 = vpop.xlane.xlu0 %1230
        %1232 = vadd.xlane.f32.xlu0 %v1173
        %v1233 = vpop.xlane.xlu0 %1232
        %1234 = vadd.xlane.f32.xlu0 %v1174
        %v1235 = vpop.xlane.xlu0 %1234
        %1236 = vadd.xlane.f32.xlu0 %v1175
        %v1237 = vpop.xlane.xlu0 %1236
        %1238 = vadd.xlane.f32.xlu0 %v1176
        %v1239 = vpop.xlane.xlu0 %1238
        %1240 = vadd.xlane.f32.xlu0 %v1177
        %v1241 = vpop.xlane.xlu0 %1240
        %v1244 = vcombine.high %v858, %v858
        %v1246 = vunpack.c.l.s4 1966171168
        %v1247 = vunpack.c.0.s8 %v1246
        %v1248 = vlaneseq
        %v1249 = vshrl.u32 %v1248, 7
        %v1250 = vsub.s32 %v1247, %v1249
        %v1251 = vrot.slane %v858, %v1250
        %v1253 = vunpack.c.l.s4 1966171168
        %v1254 = vunpack.c.0.s8 %v1253
        %v1255 = vlaneseq
        %v1256 = vshrl.u32 %v1255, 7
        %v1257 = vsub.s32 %v1254, %v1256
        %v1258 = vrot.slane %v1244, %v1257
        %v1259 = vcombine.high %v1251, %v1251
        %v1260 = vcombine.high %v1258, %v1258
        %v1262 = vunpack.c.l.s4 1966171168
        %v1263 = vunpack.c.0.s8 %v1262
        %v1264 = vlaneseq
        %v1265 = vshrl.u32 %v1264, 7
        %v1266 = vsub.s32 %v1263, %v1265
        %v1267 = vrot.slane %v1251, %v1266
        %v1269 = vunpack.c.l.s4 1966171168
        %v1270 = vunpack.c.0.s8 %v1269
        %v1271 = vlaneseq
        %v1272 = vshrl.u32 %v1271, 7
        %v1273 = vsub.s32 %v1270, %v1272
        %v1274 = vrot.slane %v1258, %v1273
        %v1276 = vunpack.c.l.s4 1966171168
        %v1277 = vunpack.c.0.s8 %v1276
        %v1278 = vlaneseq
        %v1279 = vshrl.u32 %v1278, 7
        %v1280 = vsub.s32 %v1277, %v1279
        %v1281 = vrot.slane %v1259, %v1280
        %v1283 = vunpack.c.l.s4 1966171168
        %v1284 = vunpack.c.0.s8 %v1283
        %v1285 = vlaneseq
        %v1286 = vshrl.u32 %v1285, 7
        %v1287 = vsub.s32 %v1284, %v1286
        %v1288 = vrot.slane %v1260, %v1287
        %v1289 = vcombine.high %v1267, %v1267
        %v1290 = vcombine.high %v1274, %v1274
        %v1291 = vcombine.high %v1281, %v1281
        %v1292 = vcombine.high %v1288, %v1288
        %v1293 = vcombine.high %v862, %v862
        %v1295 = vunpack.c.l.s4 1966171168
        %v1296 = vunpack.c.0.s8 %v1295
        %v1297 = vlaneseq
        %v1298 = vshrl.u32 %v1297, 7
        %v1299 = vsub.s32 %v1296, %v1298
        %v1300 = vrot.slane %v862, %v1299
        %v1302 = vunpack.c.l.s4 1966171168
        %v1303 = vunpack.c.0.s8 %v1302
        %v1304 = vlaneseq
        %v1305 = vshrl.u32 %v1304, 7
        %v1306 = vsub.s32 %v1303, %v1305
        %v1307 = vrot.slane %v1293, %v1306
        %v1308 = vcombine.high %v1300, %v1300
        %v1309 = vcombine.high %v1307, %v1307
        %v1311 = vunpack.c.l.s4 1966171168
        %v1312 = vunpack.c.0.s8 %v1311
        %v1313 = vlaneseq
        %v1314 = vshrl.u32 %v1313, 7
        %v1315 = vsub.s32 %v1312, %v1314
        %v1316 = vrot.slane %v1300, %v1315
        %v1318 = vunpack.c.l.s4 1966171168
        %v1319 = vunpack.c.0.s8 %v1318
        %v1320 = vlaneseq
        %v1321 = vshrl.u32 %v1320, 7
        %v1322 = vsub.s32 %v1319, %v1321
        %v1323 = vrot.slane %v1307, %v1322
        %v1325 = vunpack.c.l.s4 1966171168
        %v1326 = vunpack.c.0.s8 %v1325
        %v1327 = vlaneseq
        %v1328 = vshrl.u32 %v1327, 7
        %v1329 = vsub.s32 %v1326, %v1328
        %v1330 = vrot.slane %v1308, %v1329
        %v1332 = vunpack.c.l.s4 1966171168
        %v1333 = vunpack.c.0.s8 %v1332
        %v1334 = vlaneseq
        %v1335 = vshrl.u32 %v1334, 7
        %v1336 = vsub.s32 %v1333, %v1335
        %v1337 = vrot.slane %v1309, %v1336
        %v1338 = vcombine.high %v1316, %v1316
        %v1339 = vcombine.high %v1323, %v1323
        %v1340 = vcombine.high %v1330, %v1330
        %v1341 = vcombine.high %v1337, %v1337
        %v1342 = vlaneseq
        %v1343 = vshrl.u32 %v1342, 7
        %v1344 = vsub.s32 0, %v1343
        %v1345 = vrot.slane %v1267, %v1344
        %v1346 = vlaneseq
        %v1347 = vshrl.u32 %v1346, 7
        %v1348 = vsub.s32 0, %v1347
        %v1349 = vrot.slane %v1281, %v1348
        %v1350 = vlaneseq
        %v1351 = vshrl.u32 %v1350, 7
        %v1352 = vsub.s32 0, %v1351
        %v1353 = vrot.slane %v1289, %v1352
        %v1354 = vlaneseq
        %v1355 = vshrl.u32 %v1354, 7
        %v1356 = vsub.s32 0, %v1355
        %v1357 = vrot.slane %v1291, %v1356
        %v1358 = vlaneseq
        %v1359 = vshrl.u32 %v1358, 7
        %v1360 = vsub.s32 0, %v1359
        %v1361 = vrot.slane %v1274, %v1360
        %v1362 = vlaneseq
        %v1363 = vshrl.u32 %v1362, 7
        %v1364 = vsub.s32 0, %v1363
        %v1365 = vrot.slane %v1288, %v1364
        %v1366 = vlaneseq
        %v1367 = vshrl.u32 %v1366, 7
        %v1368 = vsub.s32 0, %v1367
        %v1369 = vrot.slane %v1290, %v1368
        %v1370 = vlaneseq
        %v1371 = vshrl.u32 %v1370, 7
        %v1372 = vsub.s32 0, %v1371
        %v1373 = vrot.slane %v1292, %v1372
        %v1374 = vlaneseq
        %v1375 = vshrl.u32 %v1374, 7
        %v1376 = vsub.s32 0, %v1375
        %v1377 = vrot.slane %v1316, %v1376
        %v1378 = vlaneseq
        %v1379 = vshrl.u32 %v1378, 7
        %v1380 = vsub.s32 0, %v1379
        %v1381 = vrot.slane %v1330, %v1380
        %v1382 = vlaneseq
        %v1383 = vshrl.u32 %v1382, 7
        %v1384 = vsub.s32 0, %v1383
        %v1385 = vrot.slane %v1338, %v1384
        %v1386 = vlaneseq
        %v1387 = vshrl.u32 %v1386, 7
        %v1388 = vsub.s32 0, %v1387
        %v1389 = vrot.slane %v1340, %v1388
        %v1390 = vlaneseq
        %v1391 = vshrl.u32 %v1390, 7
        %v1392 = vsub.s32 0, %v1391
        %v1393 = vrot.slane %v1323, %v1392
        %v1394 = vlaneseq
        %v1395 = vshrl.u32 %v1394, 7
        %v1396 = vsub.s32 0, %v1395
        %v1397 = vrot.slane %v1337, %v1396
        %v1398 = vlaneseq
        %v1399 = vshrl.u32 %v1398, 7
        %v1400 = vsub.s32 0, %v1399
        %v1401 = vrot.slane %v1339, %v1400
        %v1402 = vlaneseq
        %v1403 = vshrl.u32 %v1402, 7
        %v1404 = vsub.s32 0, %v1403
        %v1405 = vrot.slane %v1341, %v1404
        %v1422 = vadd.f32 %v1345, %v774
        %v1423 = vadd.f32 %v1345, %v778
        %v1424 = vadd.f32 %v1349, %v774
        %v1425 = vadd.f32 %v1349, %v778
        %v1426 = vadd.f32 %v1353, %v774
        %v1427 = vadd.f32 %v1353, %v778
        %v1428 = vadd.f32 %v1357, %v774
        %v1429 = vadd.f32 %v1357, %v778
        %v1430 = vadd.f32 %v1361, %v774
        %v1431 = vadd.f32 %v1361, %v778
        %v1432 = vadd.f32 %v1365, %v774
        %v1433 = vadd.f32 %v1365, %v778
        %v1434 = vadd.f32 %v1369, %v774
        %v1435 = vadd.f32 %v1369, %v778
        %v1436 = vadd.f32 %v1373, %v774
        %v1437 = vadd.f32 %v1373, %v778
        %v1438 = vadd.f32 %v1377, %v774
        %v1439 = vadd.f32 %v1377, %v778
        %v1440 = vadd.f32 %v1381, %v774
        %v1441 = vadd.f32 %v1381, %v778
        %v1442 = vadd.f32 %v1385, %v774
        %v1443 = vadd.f32 %v1385, %v778
        %v1444 = vadd.f32 %v1389, %v774
        %v1445 = vadd.f32 %v1389, %v778
        %v1446 = vadd.f32 %v1393, %v774
        %v1447 = vadd.f32 %v1393, %v778
        %v1448 = vadd.f32 %v1397, %v774
        %v1449 = vadd.f32 %v1397, %v778
        %v1450 = vadd.f32 %v1401, %v774
        %v1451 = vadd.f32 %v1401, %v778
        %v1452 = vadd.f32 %v1405, %v774
        %v1453 = vadd.f32 %v1405, %v778
        %v1454 = vmul.f32 %v1422, 0.2
        %v1455 = vmul.f32 %v1423, 0.2
        %v1456 = vmul.f32 %v1424, 0.2
        %v1457 = vmul.f32 %v1425, 0.2
        %v1458 = vmul.f32 %v1426, 0.2
        %v1459 = vmul.f32 %v1427, 0.2
        %v1460 = vmul.f32 %v1428, 0.2
        %v1461 = vmul.f32 %v1429, 0.2
        %v1462 = vmul.f32 %v1430, 0.2
        %v1463 = vmul.f32 %v1431, 0.2
        %v1464 = vmul.f32 %v1432, 0.2
        %v1465 = vmul.f32 %v1433, 0.2
        %v1466 = vmul.f32 %v1434, 0.2
        %v1467 = vmul.f32 %v1435, 0.2
        %v1468 = vmul.f32 %v1436, 0.2
        %v1469 = vmul.f32 %v1437, 0.2
        %v1470 = vmul.f32 %v1438, 0.2
        %v1471 = vmul.f32 %v1439, 0.2
        %v1472 = vmul.f32 %v1440, 0.2
        %v1473 = vmul.f32 %v1441, 0.2
        %v1474 = vmul.f32 %v1442, 0.2
        %v1475 = vmul.f32 %v1443, 0.2
        %v1476 = vmul.f32 %v1444, 0.2
        %v1477 = vmul.f32 %v1445, 0.2
        %v1478 = vmul.f32 %v1446, 0.2
        %v1479 = vmul.f32 %v1447, 0.2
        %v1480 = vmul.f32 %v1448, 0.2
        %v1481 = vmul.f32 %v1449, 0.2
        %v1482 = vmul.f32 %v1450, 0.2
        %v1483 = vmul.f32 %v1451, 0.2
        %v1484 = vmul.f32 %v1452, 0.2
        %v1485 = vmul.f32 %v1453, 0.2
        %v1486 = vmax.f32 %v1422, %v1454
        %v1487 = vmax.f32 %v1423, %v1455
        %v1488 = vmax.f32 %v1424, %v1456
        %v1489 = vmax.f32 %v1425, %v1457
        %v1490 = vmax.f32 %v1426, %v1458
        %v1491 = vmax.f32 %v1427, %v1459
        %v1492 = vmax.f32 %v1428, %v1460
        %v1493 = vmax.f32 %v1429, %v1461
        %v1494 = vmax.f32 %v1430, %v1462
        %v1495 = vmax.f32 %v1431, %v1463
        %v1496 = vmax.f32 %v1432, %v1464
        %v1497 = vmax.f32 %v1433, %v1465
        %v1498 = vmax.f32 %v1434, %v1466
        %v1499 = vmax.f32 %v1435, %v1467
        %v1500 = vmax.f32 %v1436, %v1468
        %v1501 = vmax.f32 %v1437, %v1469
        %v1502 = vmax.f32 %v1438, %v1470
        %v1503 = vmax.f32 %v1439, %v1471
        %v1504 = vmax.f32 %v1440, %v1472
        %v1505 = vmax.f32 %v1441, %v1473
        %v1506 = vmax.f32 %v1442, %v1474
        %v1507 = vmax.f32 %v1443, %v1475
        %v1508 = vmax.f32 %v1444, %v1476
        %v1509 = vmax.f32 %v1445, %v1477
        %v1510 = vmax.f32 %v1446, %v1478
        %v1511 = vmax.f32 %v1447, %v1479
        %v1512 = vmax.f32 %v1448, %v1480
        %v1513 = vmax.f32 %v1449, %v1481
        %v1514 = vmax.f32 %v1450, %v1482
        %v1515 = vmax.f32 %v1451, %v1483
        %v1516 = vmax.f32 %v1452, %v1484
        %v1517 = vmax.f32 %v1453, %v1485
        %v1518 = vlaneseq
        %v1519 = vshrl.u32 %v1518, 7
        %v1520 = vsub.s32 1, %v1519
        %v1521 = vrot.slane %v410, %v1520
        %v1522 = vmul.f32 %v1486, %v1521
        %v1523 = vmul.f32 %v1487, %v1521
        %v1524 = vmul.f32 %v1488, %v1521
        %v1525 = vmul.f32 %v1489, %v1521
        %v1526 = vmul.f32 %v1490, %v1521
        %v1527 = vmul.f32 %v1491, %v1521
        %v1528 = vmul.f32 %v1492, %v1521
        %v1529 = vmul.f32 %v1493, %v1521
        %v1530 = vmul.f32 %v1494, %v1521
        %v1531 = vmul.f32 %v1495, %v1521
        %v1532 = vmul.f32 %v1496, %v1521
        %v1533 = vmul.f32 %v1497, %v1521
        %v1534 = vmul.f32 %v1498, %v1521
        %v1535 = vmul.f32 %v1499, %v1521
        %v1536 = vmul.f32 %v1500, %v1521
        %v1537 = vmul.f32 %v1501, %v1521
        %v1538 = vmul.f32 %v1502, %v1521
        %v1539 = vmul.f32 %v1503, %v1521
        %v1540 = vmul.f32 %v1504, %v1521
        %v1541 = vmul.f32 %v1505, %v1521
        %v1542 = vmul.f32 %v1506, %v1521
        %v1543 = vmul.f32 %v1507, %v1521
        %v1544 = vmul.f32 %v1508, %v1521
        %v1545 = vmul.f32 %v1509, %v1521
        %v1546 = vmul.f32 %v1510, %v1521
        %v1547 = vmul.f32 %v1511, %v1521
        %v1548 = vmul.f32 %v1512, %v1521
        %v1549 = vmul.f32 %v1513, %v1521
        %v1550 = vmul.f32 %v1514, %v1521
        %v1551 = vmul.f32 %v1515, %v1521
        %v1552 = vmul.f32 %v1516, %v1521
        %v1553 = vmul.f32 %v1517, %v1521
        %1554 = vadd.xlane.f32.xlu0 %v1522
        %v1555 = vpop.xlane.xlu0 %1554
        %1556 = vadd.xlane.f32.xlu0 %v1523
        %v1557 = vpop.xlane.xlu0 %1556
        %1558 = vadd.xlane.f32.xlu0 %v1524
        %v1559 = vpop.xlane.xlu0 %1558
        %1560 = vadd.xlane.f32.xlu0 %v1525
        %v1561 = vpop.xlane.xlu0 %1560
        %1562 = vadd.xlane.f32.xlu0 %v1526
        %v1563 = vpop.xlane.xlu0 %1562
        %1564 = vadd.xlane.f32.xlu0 %v1527
        %v1565 = vpop.xlane.xlu0 %1564
        %1566 = vadd.xlane.f32.xlu0 %v1528
        %v1567 = vpop.xlane.xlu0 %1566
        %1568 = vadd.xlane.f32.xlu0 %v1529
        %v1569 = vpop.xlane.xlu0 %1568
        %1570 = vadd.xlane.f32.xlu0 %v1530
        %v1571 = vpop.xlane.xlu0 %1570
        %1572 = vadd.xlane.f32.xlu0 %v1531
        %v1573 = vpop.xlane.xlu0 %1572
        %1574 = vadd.xlane.f32.xlu0 %v1532
        %v1575 = vpop.xlane.xlu0 %1574
        %1576 = vadd.xlane.f32.xlu0 %v1533
        %v1577 = vpop.xlane.xlu0 %1576
        %1578 = vadd.xlane.f32.xlu0 %v1534
        %v1579 = vpop.xlane.xlu0 %1578
        %1580 = vadd.xlane.f32.xlu0 %v1535
        %v1581 = vpop.xlane.xlu0 %1580
        %1582 = vadd.xlane.f32.xlu0 %v1536
        %v1583 = vpop.xlane.xlu0 %1582
        %1584 = vadd.xlane.f32.xlu0 %v1537
        %v1585 = vpop.xlane.xlu0 %1584
        %1586 = vadd.xlane.f32.xlu0 %v1538
        %v1587 = vpop.xlane.xlu0 %1586
        %1588 = vadd.xlane.f32.xlu0 %v1539
        %v1589 = vpop.xlane.xlu0 %1588
        %1590 = vadd.xlane.f32.xlu0 %v1540
        %v1591 = vpop.xlane.xlu0 %1590
        %1592 = vadd.xlane.f32.xlu0 %v1541
        %v1593 = vpop.xlane.xlu0 %1592
        %1594 = vadd.xlane.f32.xlu0 %v1542
        %v1595 = vpop.xlane.xlu0 %1594
        %1596 = vadd.xlane.f32.xlu0 %v1543
        %v1597 = vpop.xlane.xlu0 %1596
        %1598 = vadd.xlane.f32.xlu0 %v1544
        %v1599 = vpop.xlane.xlu0 %1598
        %1600 = vadd.xlane.f32.xlu0 %v1545
        %v1601 = vpop.xlane.xlu0 %1600
        %1602 = vadd.xlane.f32.xlu0 %v1546
        %v1603 = vpop.xlane.xlu0 %1602
        %1604 = vadd.xlane.f32.xlu0 %v1547
        %v1605 = vpop.xlane.xlu0 %1604
        %1606 = vadd.xlane.f32.xlu0 %v1548
        %v1607 = vpop.xlane.xlu0 %1606
        %1608 = vadd.xlane.f32.xlu0 %v1549
        %v1609 = vpop.xlane.xlu0 %1608
        %1610 = vadd.xlane.f32.xlu0 %v1550
        %v1611 = vpop.xlane.xlu0 %1610
        %1612 = vadd.xlane.f32.xlu0 %v1551
        %v1613 = vpop.xlane.xlu0 %1612
        %1614 = vadd.xlane.f32.xlu0 %v1552
        %v1615 = vpop.xlane.xlu0 %1614
        %1616 = vadd.xlane.f32.xlu0 %v1553
        %v1617 = vpop.xlane.xlu0 %1616
        %v1620 = vcombine.high %v860, %v860
        %v1622 = vunpack.c.l.s4 1966171168
        %v1623 = vunpack.c.0.s8 %v1622
        %v1624 = vlaneseq
        %v1625 = vshrl.u32 %v1624, 7
        %v1626 = vsub.s32 %v1623, %v1625
        %v1627 = vrot.slane %v860, %v1626
        %v1629 = vunpack.c.l.s4 1966171168
        %v1630 = vunpack.c.0.s8 %v1629
        %v1631 = vlaneseq
        %v1632 = vshrl.u32 %v1631, 7
        %v1633 = vsub.s32 %v1630, %v1632
        %v1634 = vrot.slane %v1620, %v1633
        %v1635 = vcombine.high %v1627, %v1627
        %v1636 = vcombine.high %v1634, %v1634
        %v1638 = vunpack.c.l.s4 1966171168
        %v1639 = vunpack.c.0.s8 %v1638
        %v1640 = vlaneseq
        %v1641 = vshrl.u32 %v1640, 7
        %v1642 = vsub.s32 %v1639, %v1641
        %v1643 = vrot.slane %v1627, %v1642
        %v1645 = vunpack.c.l.s4 1966171168
        %v1646 = vunpack.c.0.s8 %v1645
        %v1647 = vlaneseq
        %v1648 = vshrl.u32 %v1647, 7
        %v1649 = vsub.s32 %v1646, %v1648
        %v1650 = vrot.slane %v1634, %v1649
        %v1652 = vunpack.c.l.s4 1966171168
        %v1653 = vunpack.c.0.s8 %v1652
        %v1654 = vlaneseq
        %v1655 = vshrl.u32 %v1654, 7
        %v1656 = vsub.s32 %v1653, %v1655
        %v1657 = vrot.slane %v1635, %v1656
        %v1659 = vunpack.c.l.s4 1966171168
        %v1660 = vunpack.c.0.s8 %v1659
        %v1661 = vlaneseq
        %v1662 = vshrl.u32 %v1661, 7
        %v1663 = vsub.s32 %v1660, %v1662
        %v1664 = vrot.slane %v1636, %v1663
        %v1665 = vcombine.high %v1643, %v1643
        %v1666 = vcombine.high %v1650, %v1650
        %v1667 = vcombine.high %v1657, %v1657
        %v1668 = vcombine.high %v1664, %v1664
        %v1669 = vcombine.high %v864, %v864
        %v1671 = vunpack.c.l.s4 1966171168
        %v1672 = vunpack.c.0.s8 %v1671
        %v1673 = vlaneseq
        %v1674 = vshrl.u32 %v1673, 7
        %v1675 = vsub.s32 %v1672, %v1674
        %v1676 = vrot.slane %v864, %v1675
        %v1678 = vunpack.c.l.s4 1966171168
        %v1679 = vunpack.c.0.s8 %v1678
        %v1680 = vlaneseq
        %v1681 = vshrl.u32 %v1680, 7
        %v1682 = vsub.s32 %v1679, %v1681
        %v1683 = vrot.slane %v1669, %v1682
        %v1684 = vcombine.high %v1676, %v1676
        %v1685 = vcombine.high %v1683, %v1683
        %v1687 = vunpack.c.l.s4 1966171168
        %v1688 = vunpack.c.0.s8 %v1687
        %v1689 = vlaneseq
        %v1690 = vshrl.u32 %v1689, 7
        %v1691 = vsub.s32 %v1688, %v1690
        %v1692 = vrot.slane %v1676, %v1691
        %v1694 = vunpack.c.l.s4 1966171168
        %v1695 = vunpack.c.0.s8 %v1694
        %v1696 = vlaneseq
        %v1697 = vshrl.u32 %v1696, 7
        %v1698 = vsub.s32 %v1695, %v1697
        %v1699 = vrot.slane %v1683, %v1698
        %v1701 = vunpack.c.l.s4 1966171168
        %v1702 = vunpack.c.0.s8 %v1701
        %v1703 = vlaneseq
        %v1704 = vshrl.u32 %v1703, 7
        %v1705 = vsub.s32 %v1702, %v1704
        %v1706 = vrot.slane %v1684, %v1705
        %v1708 = vunpack.c.l.s4 1966171168
        %v1709 = vunpack.c.0.s8 %v1708
        %v1710 = vlaneseq
        %v1711 = vshrl.u32 %v1710, 7
        %v1712 = vsub.s32 %v1709, %v1711
        %v1713 = vrot.slane %v1685, %v1712
        %v1714 = vcombine.high %v1692, %v1692
        %v1715 = vcombine.high %v1699, %v1699
        %v1716 = vcombine.high %v1706, %v1706
        %v1717 = vcombine.high %v1713, %v1713
        %v1718 = vlaneseq
        %v1719 = vshrl.u32 %v1718, 7
        %v1720 = vsub.s32 0, %v1719
        %v1721 = vrot.slane %v1643, %v1720
        %v1722 = vlaneseq
        %v1723 = vshrl.u32 %v1722, 7
        %v1724 = vsub.s32 0, %v1723
        %v1725 = vrot.slane %v1657, %v1724
        %v1726 = vlaneseq
        %v1727 = vshrl.u32 %v1726, 7
        %v1728 = vsub.s32 0, %v1727
        %v1729 = vrot.slane %v1665, %v1728
        %v1730 = vlaneseq
        %v1731 = vshrl.u32 %v1730, 7
        %v1732 = vsub.s32 0, %v1731
        %v1733 = vrot.slane %v1667, %v1732
        %v1734 = vlaneseq
        %v1735 = vshrl.u32 %v1734, 7
        %v1736 = vsub.s32 0, %v1735
        %v1737 = vrot.slane %v1650, %v1736
        %v1738 = vlaneseq
        %v1739 = vshrl.u32 %v1738, 7
        %v1740 = vsub.s32 0, %v1739
        %v1741 = vrot.slane %v1664, %v1740
        %v1742 = vlaneseq
        %v1743 = vshrl.u32 %v1742, 7
        %v1744 = vsub.s32 0, %v1743
        %v1745 = vrot.slane %v1666, %v1744
        %v1746 = vlaneseq
        %v1747 = vshrl.u32 %v1746, 7
        %v1748 = vsub.s32 0, %v1747
        %v1749 = vrot.slane %v1668, %v1748
        %v1750 = vlaneseq
        %v1751 = vshrl.u32 %v1750, 7
        %v1752 = vsub.s32 0, %v1751
        %v1753 = vrot.slane %v1692, %v1752
        %v1754 = vlaneseq
        %v1755 = vshrl.u32 %v1754, 7
        %v1756 = vsub.s32 0, %v1755
        %v1757 = vrot.slane %v1706, %v1756
        %v1758 = vlaneseq
        %v1759 = vshrl.u32 %v1758, 7
        %v1760 = vsub.s32 0, %v1759
        %v1761 = vrot.slane %v1714, %v1760
        %v1762 = vlaneseq
        %v1763 = vshrl.u32 %v1762, 7
        %v1764 = vsub.s32 0, %v1763
        %v1765 = vrot.slane %v1716, %v1764
        %v1766 = vlaneseq
        %v1767 = vshrl.u32 %v1766, 7
        %v1768 = vsub.s32 0, %v1767
        %v1769 = vrot.slane %v1699, %v1768
        %v1770 = vlaneseq
        %v1771 = vshrl.u32 %v1770, 7
        %v1772 = vsub.s32 0, %v1771
        %v1773 = vrot.slane %v1713, %v1772
        %v1774 = vlaneseq
        %v1775 = vshrl.u32 %v1774, 7
        %v1776 = vsub.s32 0, %v1775
        %v1777 = vrot.slane %v1715, %v1776
        %v1778 = vlaneseq
        %v1779 = vshrl.u32 %v1778, 7
        %v1780 = vsub.s32 0, %v1779
        %v1781 = vrot.slane %v1717, %v1780
        %v1798 = vadd.f32 %v1721, %v815
        %v1799 = vadd.f32 %v1721, %v819
        %v1800 = vadd.f32 %v1725, %v815
        %v1801 = vadd.f32 %v1725, %v819
        %v1802 = vadd.f32 %v1729, %v815
        %v1803 = vadd.f32 %v1729, %v819
        %v1804 = vadd.f32 %v1733, %v815
        %v1805 = vadd.f32 %v1733, %v819
        %v1806 = vadd.f32 %v1737, %v815
        %v1807 = vadd.f32 %v1737, %v819
        %v1808 = vadd.f32 %v1741, %v815
        %v1809 = vadd.f32 %v1741, %v819
        %v1810 = vadd.f32 %v1745, %v815
        %v1811 = vadd.f32 %v1745, %v819
        %v1812 = vadd.f32 %v1749, %v815
        %v1813 = vadd.f32 %v1749, %v819
        %v1814 = vadd.f32 %v1753, %v815
        %v1815 = vadd.f32 %v1753, %v819
        %v1816 = vadd.f32 %v1757, %v815
        %v1817 = vadd.f32 %v1757, %v819
        %v1818 = vadd.f32 %v1761, %v815
        %v1819 = vadd.f32 %v1761, %v819
        %v1820 = vadd.f32 %v1765, %v815
        %v1821 = vadd.f32 %v1765, %v819
        %v1822 = vadd.f32 %v1769, %v815
        %v1823 = vadd.f32 %v1769, %v819
        %v1824 = vadd.f32 %v1773, %v815
        %v1825 = vadd.f32 %v1773, %v819
        %v1826 = vadd.f32 %v1777, %v815
        %v1827 = vadd.f32 %v1777, %v819
        %v1828 = vadd.f32 %v1781, %v815
        %v1829 = vadd.f32 %v1781, %v819
        %v1830 = vmul.f32 %v1798, 0.2
        %v1831 = vmul.f32 %v1799, 0.2
        %v1832 = vmul.f32 %v1800, 0.2
        %v1833 = vmul.f32 %v1801, 0.2
        %v1834 = vmul.f32 %v1802, 0.2
        %v1835 = vmul.f32 %v1803, 0.2
        %v1836 = vmul.f32 %v1804, 0.2
        %v1837 = vmul.f32 %v1805, 0.2
        %v1838 = vmul.f32 %v1806, 0.2
        %v1839 = vmul.f32 %v1807, 0.2
        %v1840 = vmul.f32 %v1808, 0.2
        %v1841 = vmul.f32 %v1809, 0.2
        %v1842 = vmul.f32 %v1810, 0.2
        %v1843 = vmul.f32 %v1811, 0.2
        %v1844 = vmul.f32 %v1812, 0.2
        %v1845 = vmul.f32 %v1813, 0.2
        %v1846 = vmul.f32 %v1814, 0.2
        %v1847 = vmul.f32 %v1815, 0.2
        %v1848 = vmul.f32 %v1816, 0.2
        %v1849 = vmul.f32 %v1817, 0.2
        %v1850 = vmul.f32 %v1818, 0.2
        %v1851 = vmul.f32 %v1819, 0.2
        %v1852 = vmul.f32 %v1820, 0.2
        %v1853 = vmul.f32 %v1821, 0.2
        %v1854 = vmul.f32 %v1822, 0.2
        %v1855 = vmul.f32 %v1823, 0.2
        %v1856 = vmul.f32 %v1824, 0.2
        %v1857 = vmul.f32 %v1825, 0.2
        %v1858 = vmul.f32 %v1826, 0.2
        %v1859 = vmul.f32 %v1827, 0.2
        %v1860 = vmul.f32 %v1828, 0.2
        %v1861 = vmul.f32 %v1829, 0.2
        %v1862 = vmax.f32 %v1798, %v1830
        %v1863 = vmax.f32 %v1799, %v1831
        %v1864 = vmax.f32 %v1800, %v1832
        %v1865 = vmax.f32 %v1801, %v1833
        %v1866 = vmax.f32 %v1802, %v1834
        %v1867 = vmax.f32 %v1803, %v1835
        %v1868 = vmax.f32 %v1804, %v1836
        %v1869 = vmax.f32 %v1805, %v1837
        %v1870 = vmax.f32 %v1806, %v1838
        %v1871 = vmax.f32 %v1807, %v1839
        %v1872 = vmax.f32 %v1808, %v1840
        %v1873 = vmax.f32 %v1809, %v1841
        %v1874 = vmax.f32 %v1810, %v1842
        %v1875 = vmax.f32 %v1811, %v1843
        %v1876 = vmax.f32 %v1812, %v1844
        %v1877 = vmax.f32 %v1813, %v1845
        %v1878 = vmax.f32 %v1814, %v1846
        %v1879 = vmax.f32 %v1815, %v1847
        %v1880 = vmax.f32 %v1816, %v1848
        %v1881 = vmax.f32 %v1817, %v1849
        %v1882 = vmax.f32 %v1818, %v1850
        %v1883 = vmax.f32 %v1819, %v1851
        %v1884 = vmax.f32 %v1820, %v1852
        %v1885 = vmax.f32 %v1821, %v1853
        %v1886 = vmax.f32 %v1822, %v1854
        %v1887 = vmax.f32 %v1823, %v1855
        %v1888 = vmax.f32 %v1824, %v1856
        %v1889 = vmax.f32 %v1825, %v1857
        %v1890 = vmax.f32 %v1826, %v1858
        %v1891 = vmax.f32 %v1827, %v1859
        %v1892 = vmax.f32 %v1828, %v1860
        %v1893 = vmax.f32 %v1829, %v1861
        %v1894 = vlaneseq
        %v1895 = vshrl.u32 %v1894, 7
        %v1896 = vsub.s32 2, %v1895
        %v1897 = vrot.slane %v410, %v1896
        %v1898 = vmul.f32 %v1862, %v1897
        %v1899 = vmul.f32 %v1863, %v1897
        %v1900 = vmul.f32 %v1864, %v1897
        %v1901 = vmul.f32 %v1865, %v1897
        %v1902 = vmul.f32 %v1866, %v1897
        %v1903 = vmul.f32 %v1867, %v1897
        %v1904 = vmul.f32 %v1868, %v1897
        %v1905 = vmul.f32 %v1869, %v1897
        %v1906 = vmul.f32 %v1870, %v1897
        %v1907 = vmul.f32 %v1871, %v1897
        %v1908 = vmul.f32 %v1872, %v1897
        %v1909 = vmul.f32 %v1873, %v1897
        %v1910 = vmul.f32 %v1874, %v1897
        %v1911 = vmul.f32 %v1875, %v1897
        %v1912 = vmul.f32 %v1876, %v1897
        %v1913 = vmul.f32 %v1877, %v1897
        %v1914 = vmul.f32 %v1878, %v1897
        %v1915 = vmul.f32 %v1879, %v1897
        %v1916 = vmul.f32 %v1880, %v1897
        %v1917 = vmul.f32 %v1881, %v1897
        %v1918 = vmul.f32 %v1882, %v1897
        %v1919 = vmul.f32 %v1883, %v1897
        %v1920 = vmul.f32 %v1884, %v1897
        %v1921 = vmul.f32 %v1885, %v1897
        %v1922 = vmul.f32 %v1886, %v1897
        %v1923 = vmul.f32 %v1887, %v1897
        %v1924 = vmul.f32 %v1888, %v1897
        %v1925 = vmul.f32 %v1889, %v1897
        %v1926 = vmul.f32 %v1890, %v1897
        %v1927 = vmul.f32 %v1891, %v1897
        %v1928 = vmul.f32 %v1892, %v1897
        %v1929 = vmul.f32 %v1893, %v1897
        %1930 = vadd.xlane.f32.xlu0 %v1898
        %v1931 = vpop.xlane.xlu0 %1930
        %1932 = vadd.xlane.f32.xlu0 %v1899
        %v1933 = vpop.xlane.xlu0 %1932
        %1934 = vadd.xlane.f32.xlu0 %v1900
        %v1935 = vpop.xlane.xlu0 %1934
        %1936 = vadd.xlane.f32.xlu0 %v1901
        %v1937 = vpop.xlane.xlu0 %1936
        %1938 = vadd.xlane.f32.xlu0 %v1902
        %v1939 = vpop.xlane.xlu0 %1938
        %1940 = vadd.xlane.f32.xlu0 %v1903
        %v1941 = vpop.xlane.xlu0 %1940
        %1942 = vadd.xlane.f32.xlu0 %v1904
        %v1943 = vpop.xlane.xlu0 %1942
        %1944 = vadd.xlane.f32.xlu0 %v1905
        %v1945 = vpop.xlane.xlu0 %1944
        %1946 = vadd.xlane.f32.xlu0 %v1906
        %v1947 = vpop.xlane.xlu0 %1946
        %1948 = vadd.xlane.f32.xlu0 %v1907
        %v1949 = vpop.xlane.xlu0 %1948
        %1950 = vadd.xlane.f32.xlu0 %v1908
        %v1951 = vpop.xlane.xlu0 %1950
        %1952 = vadd.xlane.f32.xlu0 %v1909
        %v1953 = vpop.xlane.xlu0 %1952
        %1954 = vadd.xlane.f32.xlu0 %v1910
        %v1955 = vpop.xlane.xlu0 %1954
        %1956 = vadd.xlane.f32.xlu0 %v1911
        %v1957 = vpop.xlane.xlu0 %1956
        %1958 = vadd.xlane.f32.xlu0 %v1912
        %v1959 = vpop.xlane.xlu0 %1958
        %1960 = vadd.xlane.f32.xlu0 %v1913
        %v1961 = vpop.xlane.xlu0 %1960
        %1962 = vadd.xlane.f32.xlu0 %v1914
        %v1963 = vpop.xlane.xlu0 %1962
        %1964 = vadd.xlane.f32.xlu0 %v1915
        %v1965 = vpop.xlane.xlu0 %1964
        %1966 = vadd.xlane.f32.xlu0 %v1916
        %v1967 = vpop.xlane.xlu0 %1966
        %1968 = vadd.xlane.f32.xlu0 %v1917
        %v1969 = vpop.xlane.xlu0 %1968
        %1970 = vadd.xlane.f32.xlu0 %v1918
        %v1971 = vpop.xlane.xlu0 %1970
        %1972 = vadd.xlane.f32.xlu0 %v1919
        %v1973 = vpop.xlane.xlu0 %1972
        %1974 = vadd.xlane.f32.xlu0 %v1920
        %v1975 = vpop.xlane.xlu0 %1974
        %1976 = vadd.xlane.f32.xlu0 %v1921
        %v1977 = vpop.xlane.xlu0 %1976
        %1978 = vadd.xlane.f32.xlu0 %v1922
        %v1979 = vpop.xlane.xlu0 %1978
        %1980 = vadd.xlane.f32.xlu0 %v1923
        %v1981 = vpop.xlane.xlu0 %1980
        %1982 = vadd.xlane.f32.xlu0 %v1924
        %v1983 = vpop.xlane.xlu0 %1982
        %1984 = vadd.xlane.f32.xlu0 %v1925
        %v1985 = vpop.xlane.xlu0 %1984
        %1986 = vadd.xlane.f32.xlu0 %v1926
        %v1987 = vpop.xlane.xlu0 %1986
        %1988 = vadd.xlane.f32.xlu0 %v1927
        %v1989 = vpop.xlane.xlu0 %1988
        %1990 = vadd.xlane.f32.xlu0 %v1928
        %v1991 = vpop.xlane.xlu0 %1990
        %1992 = vadd.xlane.f32.xlu0 %v1929
        %v1993 = vpop.xlane.xlu0 %1992
        %v2026 = vlaneseq
        %v2027 = vand.u32 %v2026, 127
        %v2028 = vlaneseq
        %v2029 = vshrl.u32 %v2028, 7
        %v2030 = vsub.s32 %v2027, %v2029
        %v2031 = vrot.slane %v1179, %v2030
        %v2032 = vadd.s32 %v2027, 4294967288
        %v2033 = vlaneseq
        %v2034 = vshrl.u32 %v2033, 7
        %v2035 = vsub.s32 %v2032, %v2034
        %v2036 = vrot.slane %v1181, %v2035
        %vm2037 = vcmask 130112
        %v2038 = vsel %vm2037, %v2036, %v2031
        %v2039 = vlaneseq
        %v2040 = vshrl.u32 %v2039, 7
        %v2041 = vsub.s32 %v2027, %v2040
        %v2042 = vrot.slane %v1183, %v2041
        %v2043 = vlaneseq
        %v2044 = vshrl.u32 %v2043, 7
        %v2045 = vsub.s32 %v2032, %v2044
        %v2046 = vrot.slane %v1185, %v2045
        %v2047 = vsel %vm2037, %v2046, %v2042
        %v2048 = vlaneseq
        %v2049 = vshrl.u32 %v2048, 7
        %v2050 = vsub.s32 %v2027, %v2049
        %v2051 = vrot.slane %v1187, %v2050
        %v2052 = vlaneseq
        %v2053 = vshrl.u32 %v2052, 7
        %v2054 = vsub.s32 %v2032, %v2053
        %v2055 = vrot.slane %v1189, %v2054
        %v2056 = vsel %vm2037, %v2055, %v2051
        %v2057 = vlaneseq
        %v2058 = vshrl.u32 %v2057, 7
        %v2059 = vsub.s32 %v2027, %v2058
        %v2060 = vrot.slane %v1191, %v2059
        %v2061 = vlaneseq
        %v2062 = vshrl.u32 %v2061, 7
        %v2063 = vsub.s32 %v2032, %v2062
        %v2064 = vrot.slane %v1193, %v2063
        %v2065 = vsel %vm2037, %v2064, %v2060
        %v2066 = vlaneseq
        %v2067 = vshrl.u32 %v2066, 7
        %v2068 = vsub.s32 %v2027, %v2067
        %v2069 = vrot.slane %v1195, %v2068
        %v2070 = vlaneseq
        %v2071 = vshrl.u32 %v2070, 7
        %v2072 = vsub.s32 %v2032, %v2071
        %v2073 = vrot.slane %v1197, %v2072
        %v2074 = vsel %vm2037, %v2073, %v2069
        %v2075 = vlaneseq
        %v2076 = vshrl.u32 %v2075, 7
        %v2077 = vsub.s32 %v2027, %v2076
        %v2078 = vrot.slane %v1199, %v2077
        %v2079 = vlaneseq
        %v2080 = vshrl.u32 %v2079, 7
        %v2081 = vsub.s32 %v2032, %v2080
        %v2082 = vrot.slane %v1201, %v2081
        %v2083 = vsel %vm2037, %v2082, %v2078
        %v2084 = vlaneseq
        %v2085 = vshrl.u32 %v2084, 7
        %v2086 = vsub.s32 %v2027, %v2085
        %v2087 = vrot.slane %v1203, %v2086
        %v2088 = vlaneseq
        %v2089 = vshrl.u32 %v2088, 7
        %v2090 = vsub.s32 %v2032, %v2089
        %v2091 = vrot.slane %v1205, %v2090
        %v2092 = vsel %vm2037, %v2091, %v2087
        %v2093 = vlaneseq
        %v2094 = vshrl.u32 %v2093, 7
        %v2095 = vsub.s32 %v2027, %v2094
        %v2096 = vrot.slane %v1207, %v2095
        %v2097 = vlaneseq
        %v2098 = vshrl.u32 %v2097, 7
        %v2099 = vsub.s32 %v2032, %v2098
        %v2100 = vrot.slane %v1209, %v2099
        %v2101 = vsel %vm2037, %v2100, %v2096
        %v2102 = vlaneseq
        %v2103 = vshrl.u32 %v2102, 7
        %v2104 = vsub.s32 %v2027, %v2103
        %v2105 = vrot.slane %v1211, %v2104
        %v2106 = vlaneseq
        %v2107 = vshrl.u32 %v2106, 7
        %v2108 = vsub.s32 %v2032, %v2107
        %v2109 = vrot.slane %v1213, %v2108
        %v2110 = vsel %vm2037, %v2109, %v2105
        %v2111 = vlaneseq
        %v2112 = vshrl.u32 %v2111, 7
        %v2113 = vsub.s32 %v2027, %v2112
        %v2114 = vrot.slane %v1215, %v2113
        %v2115 = vlaneseq
        %v2116 = vshrl.u32 %v2115, 7
        %v2117 = vsub.s32 %v2032, %v2116
        %v2118 = vrot.slane %v1217, %v2117
        %v2119 = vsel %vm2037, %v2118, %v2114
        %v2120 = vlaneseq
        %v2121 = vshrl.u32 %v2120, 7
        %v2122 = vsub.s32 %v2027, %v2121
        %v2123 = vrot.slane %v1219, %v2122
        %v2124 = vlaneseq
        %v2125 = vshrl.u32 %v2124, 7
        %v2126 = vsub.s32 %v2032, %v2125
        %v2127 = vrot.slane %v1221, %v2126
        %v2128 = vsel %vm2037, %v2127, %v2123
        %v2129 = vlaneseq
        %v2130 = vshrl.u32 %v2129, 7
        %v2131 = vsub.s32 %v2027, %v2130
        %v2132 = vrot.slane %v1223, %v2131
        %v2133 = vlaneseq
        %v2134 = vshrl.u32 %v2133, 7
        %v2135 = vsub.s32 %v2032, %v2134
        %v2136 = vrot.slane %v1225, %v2135
        %v2137 = vsel %vm2037, %v2136, %v2132
        %v2138 = vlaneseq
        %v2139 = vshrl.u32 %v2138, 7
        %v2140 = vsub.s32 %v2027, %v2139
        %v2141 = vrot.slane %v1227, %v2140
        %v2142 = vlaneseq
        %v2143 = vshrl.u32 %v2142, 7
        %v2144 = vsub.s32 %v2032, %v2143
        %v2145 = vrot.slane %v1229, %v2144
        %v2146 = vsel %vm2037, %v2145, %v2141
        %v2147 = vlaneseq
        %v2148 = vshrl.u32 %v2147, 7
        %v2149 = vsub.s32 %v2027, %v2148
        %v2150 = vrot.slane %v1231, %v2149
        %v2151 = vlaneseq
        %v2152 = vshrl.u32 %v2151, 7
        %v2153 = vsub.s32 %v2032, %v2152
        %v2154 = vrot.slane %v1233, %v2153
        %v2155 = vsel %vm2037, %v2154, %v2150
        %v2156 = vlaneseq
        %v2157 = vshrl.u32 %v2156, 7
        %v2158 = vsub.s32 %v2027, %v2157
        %v2159 = vrot.slane %v1235, %v2158
        %v2160 = vlaneseq
        %v2161 = vshrl.u32 %v2160, 7
        %v2162 = vsub.s32 %v2032, %v2161
        %v2163 = vrot.slane %v1237, %v2162
        %v2164 = vsel %vm2037, %v2163, %v2159
        %v2165 = vlaneseq
        %v2166 = vshrl.u32 %v2165, 7
        %v2167 = vsub.s32 %v2027, %v2166
        %v2168 = vrot.slane %v1239, %v2167
        %v2169 = vlaneseq
        %v2170 = vshrl.u32 %v2169, 7
        %v2171 = vsub.s32 %v2032, %v2170
        %v2172 = vrot.slane %v1241, %v2171
        %v2173 = vsel %vm2037, %v2172, %v2168
        %v2222 = vlaneseq
        %v2223 = vshrl.u32 %v2222, 7
        %v2224 = vsub.s32 %v2027, %v2223
        %v2225 = vrot.slane %v1555, %v2224
        %v2226 = vlaneseq
        %v2227 = vshrl.u32 %v2226, 7
        %v2228 = vsub.s32 %v2032, %v2227
        %v2229 = vrot.slane %v1557, %v2228
        %v2230 = vsel %vm2037, %v2229, %v2225
        %v2231 = vlaneseq
        %v2232 = vshrl.u32 %v2231, 7
        %v2233 = vsub.s32 %v2027, %v2232
        %v2234 = vrot.slane %v1559, %v2233
        %v2235 = vlaneseq
        %v2236 = vshrl.u32 %v2235, 7
        %v2237 = vsub.s32 %v2032, %v2236
        %v2238 = vrot.slane %v1561, %v2237
        %v2239 = vsel %vm2037, %v2238, %v2234
        %v2240 = vlaneseq
        %v2241 = vshrl.u32 %v2240, 7
        %v2242 = vsub.s32 %v2027, %v2241
        %v2243 = vrot.slane %v1563, %v2242
        %v2244 = vlaneseq
        %v2245 = vshrl.u32 %v2244, 7
        %v2246 = vsub.s32 %v2032, %v2245
        %v2247 = vrot.slane %v1565, %v2246
        %v2248 = vsel %vm2037, %v2247, %v2243
        %v2249 = vlaneseq
        %v2250 = vshrl.u32 %v2249, 7
        %v2251 = vsub.s32 %v2027, %v2250
        %v2252 = vrot.slane %v1567, %v2251
        %v2253 = vlaneseq
        %v2254 = vshrl.u32 %v2253, 7
        %v2255 = vsub.s32 %v2032, %v2254
        %v2256 = vrot.slane %v1569, %v2255
        %v2257 = vsel %vm2037, %v2256, %v2252
        %v2258 = vlaneseq
        %v2259 = vshrl.u32 %v2258, 7
        %v2260 = vsub.s32 %v2027, %v2259
        %v2261 = vrot.slane %v1571, %v2260
        %v2262 = vlaneseq
        %v2263 = vshrl.u32 %v2262, 7
        %v2264 = vsub.s32 %v2032, %v2263
        %v2265 = vrot.slane %v1573, %v2264
        %v2266 = vsel %vm2037, %v2265, %v2261
        %v2267 = vlaneseq
        %v2268 = vshrl.u32 %v2267, 7
        %v2269 = vsub.s32 %v2027, %v2268
        %v2270 = vrot.slane %v1575, %v2269
        %v2271 = vlaneseq
        %v2272 = vshrl.u32 %v2271, 7
        %v2273 = vsub.s32 %v2032, %v2272
        %v2274 = vrot.slane %v1577, %v2273
        %v2275 = vsel %vm2037, %v2274, %v2270
        %v2276 = vlaneseq
        %v2277 = vshrl.u32 %v2276, 7
        %v2278 = vsub.s32 %v2027, %v2277
        %v2279 = vrot.slane %v1579, %v2278
        %v2280 = vlaneseq
        %v2281 = vshrl.u32 %v2280, 7
        %v2282 = vsub.s32 %v2032, %v2281
        %v2283 = vrot.slane %v1581, %v2282
        %v2284 = vsel %vm2037, %v2283, %v2279
        %v2285 = vlaneseq
        %v2286 = vshrl.u32 %v2285, 7
        %v2287 = vsub.s32 %v2027, %v2286
        %v2288 = vrot.slane %v1583, %v2287
        %v2289 = vlaneseq
        %v2290 = vshrl.u32 %v2289, 7
        %v2291 = vsub.s32 %v2032, %v2290
        %v2292 = vrot.slane %v1585, %v2291
        %v2293 = vsel %vm2037, %v2292, %v2288
        %v2294 = vlaneseq
        %v2295 = vshrl.u32 %v2294, 7
        %v2296 = vsub.s32 %v2027, %v2295
        %v2297 = vrot.slane %v1587, %v2296
        %v2298 = vlaneseq
        %v2299 = vshrl.u32 %v2298, 7
        %v2300 = vsub.s32 %v2032, %v2299
        %v2301 = vrot.slane %v1589, %v2300
        %v2302 = vsel %vm2037, %v2301, %v2297
        %v2303 = vlaneseq
        %v2304 = vshrl.u32 %v2303, 7
        %v2305 = vsub.s32 %v2027, %v2304
        %v2306 = vrot.slane %v1591, %v2305
        %v2307 = vlaneseq
        %v2308 = vshrl.u32 %v2307, 7
        %v2309 = vsub.s32 %v2032, %v2308
        %v2310 = vrot.slane %v1593, %v2309
        %v2311 = vsel %vm2037, %v2310, %v2306
        %v2312 = vlaneseq
        %v2313 = vshrl.u32 %v2312, 7
        %v2314 = vsub.s32 %v2027, %v2313
        %v2315 = vrot.slane %v1595, %v2314
        %v2316 = vlaneseq
        %v2317 = vshrl.u32 %v2316, 7
        %v2318 = vsub.s32 %v2032, %v2317
        %v2319 = vrot.slane %v1597, %v2318
        %v2320 = vsel %vm2037, %v2319, %v2315
        %v2321 = vlaneseq
        %v2322 = vshrl.u32 %v2321, 7
        %v2323 = vsub.s32 %v2027, %v2322
        %v2324 = vrot.slane %v1599, %v2323
        %v2325 = vlaneseq
        %v2326 = vshrl.u32 %v2325, 7
        %v2327 = vsub.s32 %v2032, %v2326
        %v2328 = vrot.slane %v1601, %v2327
        %v2329 = vsel %vm2037, %v2328, %v2324
        %v2330 = vlaneseq
        %v2331 = vshrl.u32 %v2330, 7
        %v2332 = vsub.s32 %v2027, %v2331
        %v2333 = vrot.slane %v1603, %v2332
        %v2334 = vlaneseq
        %v2335 = vshrl.u32 %v2334, 7
        %v2336 = vsub.s32 %v2032, %v2335
        %v2337 = vrot.slane %v1605, %v2336
        %v2338 = vsel %vm2037, %v2337, %v2333
        %v2339 = vlaneseq
        %v2340 = vshrl.u32 %v2339, 7
        %v2341 = vsub.s32 %v2027, %v2340
        %v2342 = vrot.slane %v1607, %v2341
        %v2343 = vlaneseq
        %v2344 = vshrl.u32 %v2343, 7
        %v2345 = vsub.s32 %v2032, %v2344
        %v2346 = vrot.slane %v1609, %v2345
        %v2347 = vsel %vm2037, %v2346, %v2342
        %v2348 = vlaneseq
        %v2349 = vshrl.u32 %v2348, 7
        %v2350 = vsub.s32 %v2027, %v2349
        %v2351 = vrot.slane %v1611, %v2350
        %v2352 = vlaneseq
        %v2353 = vshrl.u32 %v2352, 7
        %v2354 = vsub.s32 %v2032, %v2353
        %v2355 = vrot.slane %v1613, %v2354
        %v2356 = vsel %vm2037, %v2355, %v2351
        %v2357 = vlaneseq
        %v2358 = vshrl.u32 %v2357, 7
        %v2359 = vsub.s32 %v2027, %v2358
        %v2360 = vrot.slane %v1615, %v2359
        %v2361 = vlaneseq
        %v2362 = vshrl.u32 %v2361, 7
        %v2363 = vsub.s32 %v2032, %v2362
        %v2364 = vrot.slane %v1617, %v2363
        %v2365 = vsel %vm2037, %v2364, %v2360
        %v2414 = vlaneseq
        %v2415 = vshrl.u32 %v2414, 7
        %v2416 = vsub.s32 %v2027, %v2415
        %v2417 = vrot.slane %v1931, %v2416
        %v2418 = vlaneseq
        %v2419 = vshrl.u32 %v2418, 7
        %v2420 = vsub.s32 %v2032, %v2419
        %v2421 = vrot.slane %v1933, %v2420
        %v2422 = vsel %vm2037, %v2421, %v2417
        %v2423 = vlaneseq
        %v2424 = vshrl.u32 %v2423, 7
        %v2425 = vsub.s32 %v2027, %v2424
        %v2426 = vrot.slane %v1935, %v2425
        %v2427 = vlaneseq
        %v2428 = vshrl.u32 %v2427, 7
        %v2429 = vsub.s32 %v2032, %v2428
        %v2430 = vrot.slane %v1937, %v2429
        %v2431 = vsel %vm2037, %v2430, %v2426
        %v2432 = vlaneseq
        %v2433 = vshrl.u32 %v2432, 7
        %v2434 = vsub.s32 %v2027, %v2433
        %v2435 = vrot.slane %v1939, %v2434
        %v2436 = vlaneseq
        %v2437 = vshrl.u32 %v2436, 7
        %v2438 = vsub.s32 %v2032, %v2437
        %v2439 = vrot.slane %v1941, %v2438
        %v2440 = vsel %vm2037, %v2439, %v2435
        %v2441 = vlaneseq
        %v2442 = vshrl.u32 %v2441, 7
        %v2443 = vsub.s32 %v2027, %v2442
        %v2444 = vrot.slane %v1943, %v2443
        %v2445 = vlaneseq
        %v2446 = vshrl.u32 %v2445, 7
        %v2447 = vsub.s32 %v2032, %v2446
        %v2448 = vrot.slane %v1945, %v2447
        %v2449 = vsel %vm2037, %v2448, %v2444
        %v2450 = vlaneseq
        %v2451 = vshrl.u32 %v2450, 7
        %v2452 = vsub.s32 %v2027, %v2451
        %v2453 = vrot.slane %v1947, %v2452
        %v2454 = vlaneseq
        %v2455 = vshrl.u32 %v2454, 7
        %v2456 = vsub.s32 %v2032, %v2455
        %v2457 = vrot.slane %v1949, %v2456
        %v2458 = vsel %vm2037, %v2457, %v2453
        %v2459 = vlaneseq
        %v2460 = vshrl.u32 %v2459, 7
        %v2461 = vsub.s32 %v2027, %v2460
        %v2462 = vrot.slane %v1951, %v2461
        %v2463 = vlaneseq
        %v2464 = vshrl.u32 %v2463, 7
        %v2465 = vsub.s32 %v2032, %v2464
        %v2466 = vrot.slane %v1953, %v2465
        %v2467 = vsel %vm2037, %v2466, %v2462
        %v2468 = vlaneseq
        %v2469 = vshrl.u32 %v2468, 7
        %v2470 = vsub.s32 %v2027, %v2469
        %v2471 = vrot.slane %v1955, %v2470
        %v2472 = vlaneseq
        %v2473 = vshrl.u32 %v2472, 7
        %v2474 = vsub.s32 %v2032, %v2473
        %v2475 = vrot.slane %v1957, %v2474
        %v2476 = vsel %vm2037, %v2475, %v2471
        %v2477 = vlaneseq
        %v2478 = vshrl.u32 %v2477, 7
        %v2479 = vsub.s32 %v2027, %v2478
        %v2480 = vrot.slane %v1959, %v2479
        %v2481 = vlaneseq
        %v2482 = vshrl.u32 %v2481, 7
        %v2483 = vsub.s32 %v2032, %v2482
        %v2484 = vrot.slane %v1961, %v2483
        %v2485 = vsel %vm2037, %v2484, %v2480
        %v2486 = vlaneseq
        %v2487 = vshrl.u32 %v2486, 7
        %v2488 = vsub.s32 %v2027, %v2487
        %v2489 = vrot.slane %v1963, %v2488
        %v2490 = vlaneseq
        %v2491 = vshrl.u32 %v2490, 7
        %v2492 = vsub.s32 %v2032, %v2491
        %v2493 = vrot.slane %v1965, %v2492
        %v2494 = vsel %vm2037, %v2493, %v2489
        %v2495 = vlaneseq
        %v2496 = vshrl.u32 %v2495, 7
        %v2497 = vsub.s32 %v2027, %v2496
        %v2498 = vrot.slane %v1967, %v2497
        %v2499 = vlaneseq
        %v2500 = vshrl.u32 %v2499, 7
        %v2501 = vsub.s32 %v2032, %v2500
        %v2502 = vrot.slane %v1969, %v2501
        %v2503 = vsel %vm2037, %v2502, %v2498
        %v2504 = vlaneseq
        %v2505 = vshrl.u32 %v2504, 7
        %v2506 = vsub.s32 %v2027, %v2505
        %v2507 = vrot.slane %v1971, %v2506
        %v2508 = vlaneseq
        %v2509 = vshrl.u32 %v2508, 7
        %v2510 = vsub.s32 %v2032, %v2509
        %v2511 = vrot.slane %v1973, %v2510
        %v2512 = vsel %vm2037, %v2511, %v2507
        %v2513 = vlaneseq
        %v2514 = vshrl.u32 %v2513, 7
        %v2515 = vsub.s32 %v2027, %v2514
        %v2516 = vrot.slane %v1975, %v2515
        %v2517 = vlaneseq
        %v2518 = vshrl.u32 %v2517, 7
        %v2519 = vsub.s32 %v2032, %v2518
        %v2520 = vrot.slane %v1977, %v2519
        %v2521 = vsel %vm2037, %v2520, %v2516
        %v2522 = vlaneseq
        %v2523 = vshrl.u32 %v2522, 7
        %v2524 = vsub.s32 %v2027, %v2523
        %v2525 = vrot.slane %v1979, %v2524
        %v2526 = vlaneseq
        %v2527 = vshrl.u32 %v2526, 7
        %v2528 = vsub.s32 %v2032, %v2527
        %v2529 = vrot.slane %v1981, %v2528
        %v2530 = vsel %vm2037, %v2529, %v2525
        %v2531 = vlaneseq
        %v2532 = vshrl.u32 %v2531, 7
        %v2533 = vsub.s32 %v2027, %v2532
        %v2534 = vrot.slane %v1983, %v2533
        %v2535 = vlaneseq
        %v2536 = vshrl.u32 %v2535, 7
        %v2537 = vsub.s32 %v2032, %v2536
        %v2538 = vrot.slane %v1985, %v2537
        %v2539 = vsel %vm2037, %v2538, %v2534
        %v2540 = vlaneseq
        %v2541 = vshrl.u32 %v2540, 7
        %v2542 = vsub.s32 %v2027, %v2541
        %v2543 = vrot.slane %v1987, %v2542
        %v2544 = vlaneseq
        %v2545 = vshrl.u32 %v2544, 7
        %v2546 = vsub.s32 %v2032, %v2545
        %v2547 = vrot.slane %v1989, %v2546
        %v2548 = vsel %vm2037, %v2547, %v2543
        %v2549 = vlaneseq
        %v2550 = vshrl.u32 %v2549, 7
        %v2551 = vsub.s32 %v2027, %v2550
        %v2552 = vrot.slane %v1991, %v2551
        %v2553 = vlaneseq
        %v2554 = vshrl.u32 %v2553, 7
        %v2555 = vsub.s32 %v2032, %v2554
        %v2556 = vrot.slane %v1993, %v2555
        %v2557 = vsel %vm2037, %v2556, %v2552
        %vm2574 = vcmask 1040384
        %v2575 = vsel %vm2574, %v2038, %v2230
        %v2576 = vsel %vm2574, %v2047, %v2239
        %v2577 = vsel %vm2574, %v2056, %v2248
        %v2578 = vsel %vm2574, %v2065, %v2257
        %v2579 = vsel %vm2574, %v2074, %v2266
        %v2580 = vsel %vm2574, %v2083, %v2275
        %v2581 = vsel %vm2574, %v2092, %v2284
        %v2582 = vsel %vm2574, %v2101, %v2293
        %v2583 = vsel %vm2574, %v2110, %v2302
        %v2584 = vsel %vm2574, %v2119, %v2311
        %v2585 = vsel %vm2574, %v2128, %v2320
        %v2586 = vsel %vm2574, %v2137, %v2329
        %v2587 = vsel %vm2574, %v2146, %v2338
        %v2588 = vsel %vm2574, %v2155, %v2347
        %v2589 = vsel %vm2574, %v2164, %v2356
        %v2590 = vsel %vm2574, %v2173, %v2365
        %vm2591 = vcmask 1041408
        %v2592 = vsel %vm2591, %v2575, %v2422
        %v2593 = vsel %vm2591, %v2576, %v2431
        %v2594 = vsel %vm2591, %v2577, %v2440
        %v2595 = vsel %vm2591, %v2578, %v2449
        %v2596 = vsel %vm2591, %v2579, %v2458
        %v2597 = vsel %vm2591, %v2580, %v2467
        %v2598 = vsel %vm2591, %v2581, %v2476
        %v2599 = vsel %vm2591, %v2582, %v2485
        %v2600 = vsel %vm2591, %v2583, %v2494
        %v2601 = vsel %vm2591, %v2584, %v2503
        %v2602 = vsel %vm2591, %v2585, %v2512
        %v2603 = vsel %vm2591, %v2586, %v2521
        %v2604 = vsel %vm2591, %v2587, %v2530
        %v2605 = vsel %vm2591, %v2588, %v2539
        %v2606 = vsel %vm2591, %v2589, %v2548
        %v2607 = vsel %vm2591, %v2590, %v2557
        %v2610 = vcombine.high %v408, %v408
        %v2612 = vunpack.c.l.s4 1966171168
        %v2613 = vunpack.c.0.s8 %v2612
        %v2614 = vlaneseq
        %v2615 = vshrl.u32 %v2614, 7
        %v2616 = vsub.s32 %v2613, %v2615
        %v2617 = vrot.slane %v408, %v2616
        %v2619 = vunpack.c.l.s4 1966171168
        %v2620 = vunpack.c.0.s8 %v2619
        %v2621 = vlaneseq
        %v2622 = vshrl.u32 %v2621, 7
        %v2623 = vsub.s32 %v2620, %v2622
        %v2624 = vrot.slane %v2610, %v2623
        %v2625 = vcombine.high %v2617, %v2617
        %v2626 = vcombine.high %v2624, %v2624
        %v2628 = vunpack.c.l.s4 1966171168
        %v2629 = vunpack.c.0.s8 %v2628
        %v2630 = vlaneseq
        %v2631 = vshrl.u32 %v2630, 7
        %v2632 = vsub.s32 %v2629, %v2631
        %v2633 = vrot.slane %v2617, %v2632
        %v2635 = vunpack.c.l.s4 1966171168
        %v2636 = vunpack.c.0.s8 %v2635
        %v2637 = vlaneseq
        %v2638 = vshrl.u32 %v2637, 7
        %v2639 = vsub.s32 %v2636, %v2638
        %v2640 = vrot.slane %v2624, %v2639
        %v2642 = vunpack.c.l.s4 1966171168
        %v2643 = vunpack.c.0.s8 %v2642
        %v2644 = vlaneseq
        %v2645 = vshrl.u32 %v2644, 7
        %v2646 = vsub.s32 %v2643, %v2645
        %v2647 = vrot.slane %v2625, %v2646
        %v2649 = vunpack.c.l.s4 1966171168
        %v2650 = vunpack.c.0.s8 %v2649
        %v2651 = vlaneseq
        %v2652 = vshrl.u32 %v2651, 7
        %v2653 = vsub.s32 %v2650, %v2652
        %v2654 = vrot.slane %v2626, %v2653
        %v2655 = vcombine.high %v2633, %v2633
        %v2656 = vcombine.high %v2640, %v2640
        %v2657 = vcombine.high %v2647, %v2647
        %v2658 = vcombine.high %v2654, %v2654
        %v2659 = vcombine.high %v409, %v409
        %v2661 = vunpack.c.l.s4 1966171168
        %v2662 = vunpack.c.0.s8 %v2661
        %v2663 = vlaneseq
        %v2664 = vshrl.u32 %v2663, 7
        %v2665 = vsub.s32 %v2662, %v2664
        %v2666 = vrot.slane %v409, %v2665
        %v2668 = vunpack.c.l.s4 1966171168
        %v2669 = vunpack.c.0.s8 %v2668
        %v2670 = vlaneseq
        %v2671 = vshrl.u32 %v2670, 7
        %v2672 = vsub.s32 %v2669, %v2671
        %v2673 = vrot.slane %v2659, %v2672
        %v2674 = vcombine.high %v2666, %v2666
        %v2675 = vcombine.high %v2673, %v2673
        %v2677 = vunpack.c.l.s4 1966171168
        %v2678 = vunpack.c.0.s8 %v2677
        %v2679 = vlaneseq
        %v2680 = vshrl.u32 %v2679, 7
        %v2681 = vsub.s32 %v2678, %v2680
        %v2682 = vrot.slane %v2666, %v2681
        %v2684 = vunpack.c.l.s4 1966171168
        %v2685 = vunpack.c.0.s8 %v2684
        %v2686 = vlaneseq
        %v2687 = vshrl.u32 %v2686, 7
        %v2688 = vsub.s32 %v2685, %v2687
        %v2689 = vrot.slane %v2673, %v2688
        %v2691 = vunpack.c.l.s4 1966171168
        %v2692 = vunpack.c.0.s8 %v2691
        %v2693 = vlaneseq
        %v2694 = vshrl.u32 %v2693, 7
        %v2695 = vsub.s32 %v2692, %v2694
        %v2696 = vrot.slane %v2674, %v2695
        %v2698 = vunpack.c.l.s4 1966171168
        %v2699 = vunpack.c.0.s8 %v2698
        %v2700 = vlaneseq
        %v2701 = vshrl.u32 %v2700, 7
        %v2702 = vsub.s32 %v2699, %v2701
        %v2703 = vrot.slane %v2675, %v2702
        %v2704 = vcombine.high %v2682, %v2682
        %v2705 = vcombine.high %v2689, %v2689
        %v2706 = vcombine.high %v2696, %v2696
        %v2707 = vcombine.high %v2703, %v2703
        %v2708 = vlaneseq
        %v2709 = vshrl.u32 %v2708, 7
        %v2710 = vsub.s32 0, %v2709
        %v2711 = vrot.slane %v2633, %v2710
        %v2712 = vlaneseq
        %v2713 = vshrl.u32 %v2712, 7
        %v2714 = vsub.s32 0, %v2713
        %v2715 = vrot.slane %v2647, %v2714
        %v2716 = vlaneseq
        %v2717 = vshrl.u32 %v2716, 7
        %v2718 = vsub.s32 0, %v2717
        %v2719 = vrot.slane %v2655, %v2718
        %v2720 = vlaneseq
        %v2721 = vshrl.u32 %v2720, 7
        %v2722 = vsub.s32 0, %v2721
        %v2723 = vrot.slane %v2657, %v2722
        %v2724 = vlaneseq
        %v2725 = vshrl.u32 %v2724, 7
        %v2726 = vsub.s32 0, %v2725
        %v2727 = vrot.slane %v2640, %v2726
        %v2728 = vlaneseq
        %v2729 = vshrl.u32 %v2728, 7
        %v2730 = vsub.s32 0, %v2729
        %v2731 = vrot.slane %v2654, %v2730
        %v2732 = vlaneseq
        %v2733 = vshrl.u32 %v2732, 7
        %v2734 = vsub.s32 0, %v2733
        %v2735 = vrot.slane %v2656, %v2734
        %v2736 = vlaneseq
        %v2737 = vshrl.u32 %v2736, 7
        %v2738 = vsub.s32 0, %v2737
        %v2739 = vrot.slane %v2658, %v2738
        %v2740 = vlaneseq
        %v2741 = vshrl.u32 %v2740, 7
        %v2742 = vsub.s32 0, %v2741
        %v2743 = vrot.slane %v2682, %v2742
        %v2744 = vlaneseq
        %v2745 = vshrl.u32 %v2744, 7
        %v2746 = vsub.s32 0, %v2745
        %v2747 = vrot.slane %v2696, %v2746
        %v2748 = vlaneseq
        %v2749 = vshrl.u32 %v2748, 7
        %v2750 = vsub.s32 0, %v2749
        %v2751 = vrot.slane %v2704, %v2750
        %v2752 = vlaneseq
        %v2753 = vshrl.u32 %v2752, 7
        %v2754 = vsub.s32 0, %v2753
        %v2755 = vrot.slane %v2706, %v2754
        %v2756 = vlaneseq
        %v2757 = vshrl.u32 %v2756, 7
        %v2758 = vsub.s32 0, %v2757
        %v2759 = vrot.slane %v2689, %v2758
        %v2760 = vlaneseq
        %v2761 = vshrl.u32 %v2760, 7
        %v2762 = vsub.s32 0, %v2761
        %v2763 = vrot.slane %v2703, %v2762
        %v2764 = vlaneseq
        %v2765 = vshrl.u32 %v2764, 7
        %v2766 = vsub.s32 0, %v2765
        %v2767 = vrot.slane %v2705, %v2766
        %v2768 = vlaneseq
        %v2769 = vshrl.u32 %v2768, 7
        %v2770 = vsub.s32 0, %v2769
        %v2771 = vrot.slane %v2707, %v2770
        %v2788 = vadd.f32 %v2592, %v2711
        %v2789 = vadd.f32 %v2593, %v2715
        %v2790 = vadd.f32 %v2594, %v2719
        %v2791 = vadd.f32 %v2595, %v2723
        %v2792 = vadd.f32 %v2596, %v2727
        %v2793 = vadd.f32 %v2597, %v2731
        %v2794 = vadd.f32 %v2598, %v2735
        %v2795 = vadd.f32 %v2599, %v2739
        %v2796 = vadd.f32 %v2600, %v2743
        %v2797 = vadd.f32 %v2601, %v2747
        %v2798 = vadd.f32 %v2602, %v2751
        %v2799 = vadd.f32 %v2603, %v2755
        %v2800 = vadd.f32 %v2604, %v2759
        %v2801 = vadd.f32 %v2605, %v2763
        %v2802 = vadd.f32 %v2606, %v2767
        %v2803 = vadd.f32 %v2607, %v2771
        %vm2804 = vcmask 124928
        %v2805 = vsel %vm2804, %v2788, -inf
        %2806 = vmax.xlane.f32.xlu0 %v2805
        %v2807 = vpop.xlane.xlu0 %2806
        %v2808 = vsel %vm2804, %v2789, -inf
        %2809 = vmax.xlane.f32.xlu0 %v2808
        %v2810 = vpop.xlane.xlu0 %2809
        %v2811 = vsel %vm2804, %v2790, -inf
        %2812 = vmax.xlane.f32.xlu0 %v2811
        %v2813 = vpop.xlane.xlu0 %2812
        %v2814 = vsel %vm2804, %v2791, -inf
        %2815 = vmax.xlane.f32.xlu0 %v2814
        %v2816 = vpop.xlane.xlu0 %2815
        %v2817 = vsel %vm2804, %v2792, -inf
        %2818 = vmax.xlane.f32.xlu0 %v2817
        %v2819 = vpop.xlane.xlu0 %2818
        %v2820 = vsel %vm2804, %v2793, -inf
        %2821 = vmax.xlane.f32.xlu0 %v2820
        %v2822 = vpop.xlane.xlu0 %2821
        %v2823 = vsel %vm2804, %v2794, -inf
        %2824 = vmax.xlane.f32.xlu0 %v2823
        %v2825 = vpop.xlane.xlu0 %2824
        %v2826 = vsel %vm2804, %v2795, -inf
        %2827 = vmax.xlane.f32.xlu0 %v2826
        %v2828 = vpop.xlane.xlu0 %2827
        %v2829 = vsel %vm2804, %v2796, -inf
        %2830 = vmax.xlane.f32.xlu0 %v2829
        %v2831 = vpop.xlane.xlu0 %2830
        %v2832 = vsel %vm2804, %v2797, -inf
        %2833 = vmax.xlane.f32.xlu0 %v2832
        %v2834 = vpop.xlane.xlu0 %2833
        %v2835 = vsel %vm2804, %v2798, -inf
        %2836 = vmax.xlane.f32.xlu0 %v2835
        %v2837 = vpop.xlane.xlu0 %2836
        %v2838 = vsel %vm2804, %v2799, -inf
        %2839 = vmax.xlane.f32.xlu0 %v2838
        %v2840 = vpop.xlane.xlu0 %2839
        %v2841 = vsel %vm2804, %v2800, -inf
        %2842 = vmax.xlane.f32.xlu0 %v2841
        %v2843 = vpop.xlane.xlu0 %2842
        %v2844 = vsel %vm2804, %v2801, -inf
        %2845 = vmax.xlane.f32.xlu0 %v2844
        %v2846 = vpop.xlane.xlu0 %2845
        %v2847 = vsel %vm2804, %v2802, -inf
        %2848 = vmax.xlane.f32.xlu0 %v2847
        %v2849 = vpop.xlane.xlu0 %2848
        %v2850 = vsel %vm2804, %v2803, -inf
        %2851 = vmax.xlane.f32.xlu0 %v2850
        %v2852 = vpop.xlane.xlu0 %2851
        %v2853 = vsub.f32 %v2788, %v2807
        %v2854 = vsub.f32 %v2789, %v2810
        %v2855 = vsub.f32 %v2790, %v2813
        %v2856 = vsub.f32 %v2791, %v2816
        %v2857 = vsub.f32 %v2792, %v2819
        %v2858 = vsub.f32 %v2793, %v2822
        %v2859 = vsub.f32 %v2794, %v2825
        %v2860 = vsub.f32 %v2795, %v2828
        %v2861 = vsub.f32 %v2796, %v2831
        %v2862 = vsub.f32 %v2797, %v2834
        %v2863 = vsub.f32 %v2798, %v2837
        %v2864 = vsub.f32 %v2799, %v2840
        %v2865 = vsub.f32 %v2800, %v2843
        %v2866 = vsub.f32 %v2801, %v2846
        %v2867 = vsub.f32 %v2802, %v2849
        %v2868 = vsub.f32 %v2803, %v2852
        %v2869 = vmul.f32 %v2853, 1.442695
        %v2870 = vpow.pop %v2869
        %v2871 = vmul.f32 %v2854, 1.442695
        %v2872 = vpow.pop %v2871
        %v2873 = vmul.f32 %v2855, 1.442695
        %v2874 = vpow.pop %v2873
        %v2875 = vmul.f32 %v2856, 1.442695
        %v2876 = vpow.pop %v2875
        %v2877 = vmul.f32 %v2857, 1.442695
        %v2878 = vpow.pop %v2877
        %v2879 = vmul.f32 %v2858, 1.442695
        %v2880 = vpow.pop %v2879
        %v2881 = vmul.f32 %v2859, 1.442695
        %v2882 = vpow.pop %v2881
        %v2883 = vmul.f32 %v2860, 1.442695
        %v2884 = vpow.pop %v2883
        %v2885 = vmul.f32 %v2861, 1.442695
        %v2886 = vpow.pop %v2885
        %v2887 = vmul.f32 %v2862, 1.442695
        %v2888 = vpow.pop %v2887
        %v2889 = vmul.f32 %v2863, 1.442695
        %v2890 = vpow.pop %v2889
        %v2891 = vmul.f32 %v2864, 1.442695
        %v2892 = vpow.pop %v2891
        %v2893 = vmul.f32 %v2865, 1.442695
        %v2894 = vpow.pop %v2893
        %v2895 = vmul.f32 %v2866, 1.442695
        %v2896 = vpow.pop %v2895
        %v2897 = vmul.f32 %v2867, 1.442695
        %v2898 = vpow.pop %v2897
        %v2899 = vmul.f32 %v2868, 1.442695
        %v2900 = vpow.pop %v2899
        %v2901 = vsel %vm2804, %v2870, 0.0
        %2902 = vadd.xlane.f32.xlu0 %v2901
        %v2903 = vpop.xlane.xlu0 %2902
        %v2904 = vsel %vm2804, %v2872, 0.0
        %2905 = vadd.xlane.f32.xlu0 %v2904
        %v2906 = vpop.xlane.xlu0 %2905
        %v2907 = vsel %vm2804, %v2874, 0.0
        %2908 = vadd.xlane.f32.xlu0 %v2907
        %v2909 = vpop.xlane.xlu0 %2908
        %v2910 = vsel %vm2804, %v2876, 0.0
        %2911 = vadd.xlane.f32.xlu0 %v2910
        %v2912 = vpop.xlane.xlu0 %2911
        %v2913 = vsel %vm2804, %v2878, 0.0
        %2914 = vadd.xlane.f32.xlu0 %v2913
        %v2915 = vpop.xlane.xlu0 %2914
        %v2916 = vsel %vm2804, %v2880, 0.0
        %2917 = vadd.xlane.f32.xlu0 %v2916
        %v2918 = vpop.xlane.xlu0 %2917
        %v2919 = vsel %vm2804, %v2882, 0.0
        %2920 = vadd.xlane.f32.xlu0 %v2919
        %v2921 = vpop.xlane.xlu0 %2920
        %v2922 = vsel %vm2804, %v2884, 0.0
        %2923 = vadd.xlane.f32.xlu0 %v2922
        %v2924 = vpop.xlane.xlu0 %2923
        %v2925 = vsel %vm2804, %v2886, 0.0
        %2926 = vadd.xlane.f32.xlu0 %v2925
        %v2927 = vpop.xlane.xlu0 %2926
        %v2928 = vsel %vm2804, %v2888, 0.0
        %2929 = vadd.xlane.f32.xlu0 %v2928
        %v2930 = vpop.xlane.xlu0 %2929
        %v2931 = vsel %vm2804, %v2890, 0.0
        %2932 = vadd.xlane.f32.xlu0 %v2931
        %v2933 = vpop.xlane.xlu0 %2932
        %v2934 = vsel %vm2804, %v2892, 0.0
        %2935 = vadd.xlane.f32.xlu0 %v2934
        %v2936 = vpop.xlane.xlu0 %2935
        %v2937 = vsel %vm2804, %v2894, 0.0
        %2938 = vadd.xlane.f32.xlu0 %v2937
        %v2939 = vpop.xlane.xlu0 %2938
        %v2940 = vsel %vm2804, %v2896, 0.0
        %2941 = vadd.xlane.f32.xlu0 %v2940
        %v2942 = vpop.xlane.xlu0 %2941
        %v2943 = vsel %vm2804, %v2898, 0.0
        %2944 = vadd.xlane.f32.xlu0 %v2943
        %v2945 = vpop.xlane.xlu0 %2944
        %v2946 = vsel %vm2804, %v2900, 0.0
        %2947 = vadd.xlane.f32.xlu0 %v2946
        %v2948 = vpop.xlane.xlu0 %2947
        %v2949 = vrcp.pop %v2903
        %v2950 = vrcp.pop %v2906
        %v2951 = vrcp.pop %v2909
        %v2952 = vrcp.pop %v2912
        %v2953 = vrcp.pop %v2915
        %v2954 = vrcp.pop %v2918
        %v2955 = vrcp.pop %v2921
        %v2956 = vrcp.pop %v2924
        %v2957 = vrcp.pop %v2927
        %v2958 = vrcp.pop %v2930
        %v2959 = vrcp.pop %v2933
        %v2960 = vrcp.pop %v2936
        %v2961 = vrcp.pop %v2939
        %v2962 = vrcp.pop %v2942
        %v2963 = vrcp.pop %v2945
        %v2964 = vrcp.pop %v2948
        %v2965 = vmul.f32 %v2870, %v2949
        %v2966 = vmul.f32 %v2872, %v2950
        %v2967 = vmul.f32 %v2874, %v2951
        %v2968 = vmul.f32 %v2876, %v2952
        %v2969 = vmul.f32 %v2878, %v2953
        %v2970 = vmul.f32 %v2880, %v2954
        %v2971 = vmul.f32 %v2882, %v2955
        %v2972 = vmul.f32 %v2884, %v2956
        %v2973 = vmul.f32 %v2886, %v2957
        %v2974 = vmul.f32 %v2888, %v2958
        %v2975 = vmul.f32 %v2890, %v2959
        %v2976 = vmul.f32 %v2892, %v2960
        %v2977 = vmul.f32 %v2894, %v2961
        %v2978 = vmul.f32 %v2896, %v2962
        %v2979 = vmul.f32 %v2898, %v2963
        %v2980 = vmul.f32 %v2900, %v2964
        %v2997 = vrot.slane %v2966, 7
        %vm2998 = vcmask 1041409
        %v2999 = vsel %vm2998, %v2997, %v2965
        %v3000 = vrot.slane %v2967, 6
        %vm3001 = vcmask 1042434
        %v3002 = vsel %vm3001, %v3000, %v2999
        %v3003 = vrot.slane %v2968, 5
        %vm3004 = vcmask 1043459
        %v3005 = vsel %vm3004, %v3003, %v3002
        %v3006 = vrot.slane %v2969, 4
        %vm3007 = vcmask 1044484
        %v3008 = vsel %vm3007, %v3006, %v3005
        %v3009 = vrot.slane %v2970, 3
        %vm3010 = vcmask 1045509
        %v3011 = vsel %vm3010, %v3009, %v3008
        %v3012 = vrot.slane %v2971, 2
        %vm3013 = vcmask 1046534
        %v3014 = vsel %vm3013, %v3012, %v3011
        %v3015 = vrot.slane %v2972, 1
        %vm3016 = vcmask 1047559
        %v3017 = vsel %vm3016, %v3015, %v3014
        %v3018 = vrot.slane %v2974, 7
        %v3019 = vsel %vm2998, %v3018, %v2973
        %v3020 = vrot.slane %v2975, 6
        %v3021 = vsel %vm3001, %v3020, %v3019
        %v3022 = vrot.slane %v2976, 5
        %v3023 = vsel %vm3004, %v3022, %v3021
        %v3024 = vrot.slane %v2977, 4
        %v3025 = vsel %vm3007, %v3024, %v3023
        %v3026 = vrot.slane %v2978, 3
        %v3027 = vsel %vm3010, %v3026, %v3025
        %v3028 = vrot.slane %v2979, 2
        %v3029 = vsel %vm3013, %v3028, %v3027
        %v3030 = vrot.slane %v2980, 1
        %v3031 = vsel %vm3016, %v3030, %v3029
        %v3034 = vrot.slane %v2965, 1
        %v3035 = vsel %vm2998, %v2966, %v3034
        %v3036 = vrot.slane %v2967, 7
        %v3037 = vsel %vm3001, %v3036, %v3035
        %v3038 = vrot.slane %v2968, 6
        %v3039 = vsel %vm3004, %v3038, %v3037
        %v3040 = vrot.slane %v2969, 5
        %v3041 = vsel %vm3007, %v3040, %v3039
        %v3042 = vrot.slane %v2970, 4
        %v3043 = vsel %vm3010, %v3042, %v3041
        %v3044 = vrot.slane %v2971, 3
        %v3045 = vsel %vm3013, %v3044, %v3043
        %v3046 = vrot.slane %v2972, 2
        %v3047 = vsel %vm3016, %v3046, %v3045
        %v3048 = vrot.slane %v2973, 1
        %v3049 = vsel %vm2998, %v2974, %v3048
        %v3050 = vrot.slane %v2975, 7
        %v3051 = vsel %vm3001, %v3050, %v3049
        %v3052 = vrot.slane %v2976, 6
        %v3053 = vsel %vm3004, %v3052, %v3051
        %v3054 = vrot.slane %v2977, 5
        %v3055 = vsel %vm3007, %v3054, %v3053
        %v3056 = vrot.slane %v2978, 4
        %v3057 = vsel %vm3010, %v3056, %v3055
        %v3058 = vrot.slane %v2979, 3
        %v3059 = vsel %vm3013, %v3058, %v3057
        %v3060 = vrot.slane %v2980, 2
        %v3061 = vsel %vm3016, %v3060, %v3059
        %3062 = vrot.lane.b32.xlu0 %v3047, 16
        %v3063 = vpop.permute.xlu0 %3062
        %3064 = vrot.lane.b32.xlu0 %v3061, 16
        %v3065 = vpop.permute.xlu0 %3064
        %v3068 = vrot.slane %v2965, 2
        %v3069 = vrot.slane %v2966, 1
        %v3070 = vsel %vm2998, %v3069, %v3068
        %v3071 = vsel %vm3001, %v2967, %v3070
        %v3072 = vrot.slane %v2968, 7
        %v3073 = vsel %vm3004, %v3072, %v3071
        %v3074 = vrot.slane %v2969, 6
        %v3075 = vsel %vm3007, %v3074, %v3073
        %v3076 = vrot.slane %v2970, 5
        %v3077 = vsel %vm3010, %v3076, %v3075
        %v3078 = vrot.slane %v2971, 4
        %v3079 = vsel %vm3013, %v3078, %v3077
        %v3080 = vrot.slane %v2972, 3
        %v3081 = vsel %vm3016, %v3080, %v3079
        %v3082 = vrot.slane %v2973, 2
        %v3083 = vrot.slane %v2974, 1
        %v3084 = vsel %vm2998, %v3083, %v3082
        %v3085 = vsel %vm3001, %v2975, %v3084
        %v3086 = vrot.slane %v2976, 7
        %v3087 = vsel %vm3004, %v3086, %v3085
        %v3088 = vrot.slane %v2977, 6
        %v3089 = vsel %vm3007, %v3088, %v3087
        %v3090 = vrot.slane %v2978, 5
        %v3091 = vsel %vm3010, %v3090, %v3089
        %v3092 = vrot.slane %v2979, 4
        %v3093 = vsel %vm3013, %v3092, %v3091
        %v3094 = vrot.slane %v2980, 3
        %v3095 = vsel %vm3016, %v3094, %v3093
        %3096 = vrot.lane.b32.xlu0 %v3081, 32
        %v3097 = vpop.permute.xlu0 %3096
        %3098 = vrot.lane.b32.xlu0 %v3095, 32
        %v3099 = vpop.permute.xlu0 %3098
        %vm3102 = vcmask 130048
        %v3103 = vsel %vm3102, %v3017, %v3063
        %v3104 = vsel %vm3102, %v3031, %v3065
        %vm3105 = vcmask 261120
        %v3106 = vsel %vm3105, %v3103, %v3097
        %v3107 = vsel %vm3105, %v3104, %v3099
        %v3108 = vpack.c.bf16 %v3107, %v3106
        %v3109 = vpack.c.bf16 %v776, %v772
        %v3110 = vpack.c.bf16 %v778, %v774
        %v3111 = vpack.c.bf16 %v819, %v815
        %vm3112 = vcmask 392192
        %v3114 = vsel %vm3112, %v3108, 0
        %3116 = vmatprep.subr.bf16.mxu0 0
        %3117 = vmatpush1.bf16.msra.mxu0 0
        %3118 = vmatprep.subr.bf16.mxu0 0
        %3119 = vmatpush1.bf16.msra.mxu0 0
        %3120 = vmatprep.subr.bf16.mxu0 0
        %3121 = vmatpush1.bf16.msra.mxu0 0
        %3122 = vmatprep.subr.bf16.mxu0 0
        %3123 = vmatpush1.bf16.msra.mxu0 0
        %3124 = vmatprep.subr.bf16.mxu0 0
        %3125 = vmatpush1.bf16.msra.mxu0 0
        %3126 = vmatprep.subr.bf16.mxu0 0
        %3127 = vmatpush1.bf16.msra.mxu0 %v3111
        %3128 = vmatprep.subr.bf16.mxu0 0
        %3129 = vmatpush1.bf16.msra.mxu0 %v3110
        %3130 = vmatprep.subr.bf16.mxu0 0
        %3131 = vmatpush1.bf16.msra.mxu0 %v3109
        %3132 = vmatprep.subr.bf16.mxu0 0
        %3133 = vmatpush2.bf16.msra.mxu0 0
        %3134 = vmatprep.subr.bf16.mxu0 0
        %3135 = vmatpush2.bf16.msra.mxu0 0
        %3136 = vmatprep.subr.bf16.mxu0 0
        %3137 = vmatpush2.bf16.msra.mxu0 0
        %3138 = vmatprep.subr.bf16.mxu0 0
        %3139 = vmatpush2.bf16.msra.mxu0 0
        %3140 = vmatprep.subr.bf16.mxu0 0
        %3141 = vmatpush2.bf16.msra.mxu0 0
        %3142 = vmatprep.subr.bf16.mxu0 0
        %3143 = vmatpush2.bf16.msra.mxu0 0
        %3144 = vmatprep.subr.bf16.mxu0 0
        %3145 = vmatpush2.bf16.msra.mxu0 0
        %3146 = vmatprep.subr.bf16.mxu0 0
        %3147 = vmatpush2.bf16.msra.mxu0 0
        %3148 = vmatprep.mubr.bf16.mxu0 0
        %3149 = vmatmul.mubr.bf16.gmra.mxu0 %v3114
        %v3150 = vpop.f32.mrf.mxu0
        %v3151 = vadd.f32 0.0, %v3150
        %v3152 = vpop.f32.mrf.mxu0
        %v3153 = vpop.f32.mrf.mxu0
        %v3154 = vadd.f32 0.0, %v3153
        %v3155 = vpop.f32.mrf.mxu0
        %3156 = vdwg.mxu0
        %v3157 = vmul.f32 %v3151, 0.33333334
        %v3158 = vmul.f32 %v3154, 0.33333334
        %v3159 = vld [vmem:[%s5] sm:$0x1]
        %v3161 = vlaneseq
        %v3162 = vshrl.u32 %v3161, 7
        %v3163 = vsub.s32 0, %v3162
        %v3164 = vrot.slane %v3159, %v3163
        %v3166 = vadd.f32 %v3157, %v3164
        %v3167 = vadd.f32 %v3158, %v3164
        %v3168 = vpack.c.bf16 %v3167, %v3166
        %v3169 = vld [vmem:[#allocation10] sm:$0xf]
        %v3170 = vld [vmem:[#allocation10 + $0x4] sm:$0xf]
        %v3171 = vld [vmem:[#allocation10 + $0x8] sm:$0xf]
        %v3172 = vld [vmem:[#allocation10 + $0xc] sm:$0xf]
        %v3173 = vld [vmem:[#allocation10 + $0x10] sm:$0xf]
        %v3174 = vld [vmem:[#allocation10 + $0x14] sm:$0xf]
        %v3175 = vld [vmem:[#allocation10 + $0x18] sm:$0xf]
        %v3176 = vld [vmem:[#allocation10 + $0x1c] sm:$0xf]
        %v3177 = vld [vmem:[#allocation10 + $0x20] sm:$0xf]
        %v3178 = vld [vmem:[#allocation10 + $0x24] sm:$0xf]
        %v3179 = vld [vmem:[#allocation10 + $0x28] sm:$0xf]
        %v3180 = vld [vmem:[#allocation10 + $0x2c] sm:$0xf]
        %v3181 = vld [vmem:[#allocation10 + $0x30] sm:$0xf]
        %v3182 = vld [vmem:[#allocation10 + $0x34] sm:$0xf]
        %v3183 = vld [vmem:[#allocation10 + $0x38] sm:$0xf]
        %v3184 = vld [vmem:[#allocation10 + $0x3c] sm:$0xf]
        %v3185 = vld [vmem:[%s7] sm:$0x1]
        %v3187 = vlaneseq
        %v3188 = vshrl.u32 %v3187, 7
        %v3189 = vsub.s32 0, %v3188
        %v3190 = vrot.slane %v3185, %v3189
        %v3208 = vunpack.c.l.b16 %v3169
        %v3209 = vunpack.c.l.b16 %v3170
        %v3210 = vunpack.c.l.b16 %v3171
        %v3211 = vunpack.c.l.b16 %v3172
        %v3212 = vunpack.c.l.b16 %v3173
        %v3213 = vunpack.c.l.b16 %v3174
        %v3214 = vunpack.c.l.b16 %v3175
        %v3215 = vunpack.c.l.b16 %v3176
        %v3216 = vunpack.c.l.b16 %v3177
        %v3217 = vunpack.c.l.b16 %v3178
        %v3218 = vunpack.c.l.b16 %v3179
        %v3219 = vunpack.c.l.b16 %v3180
        %v3220 = vunpack.c.l.b16 %v3181
        %v3221 = vunpack.c.l.b16 %v3182
        %v3222 = vunpack.c.l.b16 %v3183
        %v3223 = vunpack.c.l.b16 %v3184
        %v3224 = vpack.c.b16 %v3209, %v3208
        %v3225 = vpack.c.b16 %v3211, %v3210
        %v3226 = vpack.c.b16 %v3213, %v3212
        %v3227 = vpack.c.b16 %v3215, %v3214
        %v3228 = vpack.c.b16 %v3217, %v3216
        %v3229 = vpack.c.b16 %v3219, %v3218
        %v3230 = vpack.c.b16 %v3221, %v3220
        %v3231 = vpack.c.b16 %v3223, %v3222
        %3240 = vmatprep.subr.bf16.mxu0 0
        %3241 = vmatpush1.bf16.msra.mxu0 %v3231
        %3242 = vmatprep.subr.bf16.mxu0 0
        %3243 = vmatpush1.bf16.msra.mxu0 %v3230
        %3244 = vmatprep.subr.bf16.mxu0 0
        %3245 = vmatpush1.bf16.msra.mxu0 %v3229
        %3246 = vmatprep.subr.bf16.mxu0 0
        %3247 = vmatpush1.bf16.msra.mxu0 %v3228
        %3248 = vmatprep.subr.bf16.mxu0 0
        %3249 = vmatpush1.bf16.msra.mxu0 %v3227
        %3250 = vmatprep.subr.bf16.mxu0 0
        %3251 = vmatpush1.bf16.msra.mxu0 %v3226
        %3252 = vmatprep.subr.bf16.mxu0 0
        %3253 = vmatpush1.bf16.msra.mxu0 %v3225
        %3254 = vmatprep.subr.bf16.mxu0 0
        %3255 = vmatpush1.bf16.msra.mxu0 %v3224
        %3256 = vmatprep.subr.bf16.mxu0 0
        %3257 = vmatpush2.bf16.msra.mxu0 0
        %3258 = vmatprep.subr.bf16.mxu0 0
        %3259 = vmatpush2.bf16.msra.mxu0 0
        %3260 = vmatprep.subr.bf16.mxu0 0
        %3261 = vmatpush2.bf16.msra.mxu0 0
        %3262 = vmatprep.subr.bf16.mxu0 0
        %3263 = vmatpush2.bf16.msra.mxu0 0
        %3264 = vmatprep.subr.bf16.mxu0 0
        %3265 = vmatpush2.bf16.msra.mxu0 0
        %3266 = vmatprep.subr.bf16.mxu0 0
        %3267 = vmatpush2.bf16.msra.mxu0 0
        %3268 = vmatprep.subr.bf16.mxu0 0
        %3269 = vmatpush2.bf16.msra.mxu0 0
        %3270 = vmatprep.subr.bf16.mxu0 0
        %3271 = vmatpush2.bf16.msra.mxu0 0
        %3272 = vmatprep.mubr.bf16.mxu0 0
        %3273 = vmatmul.mubr.bf16.gmra.mxu0 %v3168
        %v3274 = vpop.f32.mrf.mxu0
        %v3275 = vadd.f32 %v3190, %v3274
        %v3276 = vpop.f32.mrf.mxu0
        %v3277 = vpop.f32.mrf.mxu0
        %v3278 = vadd.f32 %v3190, %v3277
        %v3279 = vpop.f32.mrf.mxu0
        %3280 = vdwg.mxu0
        %3281 = vst [vmem:[%s404] sm:$0xff] %v3275
        %3282 = vst [vmem:[%s404 + $0x8] sm:$0xff] %v3278
        %s3283 = sand.u32 %s215, 1
        %s3284 = scalar_lea.sflag [#allocation4], %s3283
        %s3285 = sand.u32 %s215, 1
        %s3286 = smul.addr %s3285, 16
        %s3287 = scalar_lea.vmem [#allocation11], %s3286
        // Predicated region
        $region73: #{gat_forward_pallas.1} parent=51 // pred_check
          %p3288 = pneg %p225
        $region74: #{gat_forward_pallas.1} parent=51 // pred_check_branch
          %3290 = sbr.rel (%p3288) target = $region76
        $region75: #{gat_forward_pallas.1} parent=51 // pred_region
          %s3292 = ssub.s32 256, 256
          %3293 = vsyncadd %s3284, %s3292
          %s3294 = smul.addr %s29, 2
          %s3295 = smul.addr %s3294, 128
          %s3296 = scalar_lea.hbm %s8, %s3295
          %s3297 = sshll.u32 %s3287, 4
          %s3298 = int_to_ptr.vmem [resolvable:$true] %s3297
          %3303 = dma.vmem_to_hbm [thread:$0]  %s3298, 256, %s3296, %s3284, 128, 128, 8
        $region76: #{gat_forward_pallas.1} parent=51 // pred_fallthru
          _
      $region52: #{gat_forward_pallas.1} parent=5 // pred_fallthru
        _
      %p3304 = scmp.le.s32.totalorder 2, %s24
      // Predicated region
      $region77: #{gat_forward_pallas.1} parent=5 // pred_check
        %p3305 = pneg %p3304
      $region78: #{gat_forward_pallas.1} parent=5 // pred_check_branch
        %3307 = sbr.rel (%p3305) target = $region80
      $region79: #{gat_forward_pallas.1} parent=5 // pred_region
        %s3308 = ssub.s32 %s24, 2
        // Predicated region
        $region81: #{gat_forward_pallas.1} parent=79 // pred_check
          %p3309 = pneg %p231
        $region82: #{gat_forward_pallas.1} parent=79 // pred_check_branch
          %3311 = sbr.rel (%p3309) target = $region84
        $region83: #{gat_forward_pallas.1} parent=79 // pred_region
          %s3312 = sand.u32 %s216, 1
          %s3313 = scalar_lea.sflag [#allocation4], %s3312
          %s3314 = sand.u32 %s216, 1
          %s3315 = smul.addr %s3314, 16
          %s3316 = scalar_lea.vmem [#allocation11], %s3315
          %3317 = dma.done %s3313, 256
        $region84: #{gat_forward_pallas.1} parent=79 // pred_fallthru
          _
      $region80: #{gat_forward_pallas.1} parent=5 // pred_fallthru
        _
    $region6: #{gat_forward_pallas.1} parent=1 // loop_footer
      %s28 = sadd.s32 1, %s24
    $region7: #{gat_forward_pallas.1} parent=1 // loop_footer_branch
      %23 = sbr.rel target = $region3
    $region8: #{gat_forward_pallas.1} parent=1 // loop_exit
      _
    %3318 = vsyncpa [#allocation3], 1
    %s3319 = scalar_lea.sflag [#allocation3], 1
    %3320 = vsyncpa %s3319, 1
    %3321 = vsyncpa [#allocation6], 1
    %s3322 = scalar_lea.sflag [#allocation6], 1
    %3323 = vsyncpa %s3322, 1
    %3324 = vsyncpa [#allocation9], 1
    %3325 = vsyncpa [#allocation4], 1
    %s3326 = scalar_lea.sflag [#allocation4], 1
    %3327 = vsyncpa %s3326, 1

</llo_original>
